<compile_context>
chip_gen: v6e
topology: v6e:2x2x1
jax: 0.10.0
libtpu: 0.0.40
codegen_flags: <defaults>
</compile_context>

<pallas_src>
from functools import partial

import numpy as np
import jax
import jax.numpy as jnp
from jax import lax
from jax.experimental import pallas as pl
from jax.experimental.pallas import tpu as pltpu


def _round_up(x, m):
    return (x + m - 1) // m * m


# ----------------------------------------------------------------------------
# Pallas kernel: full BP fixed-point loop in VMEM, class-major layout.
#   priors_ref  [2, Np]   node priors (class-major, lane-padded)
#   pot_t_ref   [2, 2]    pairwise potential, transposed
#   gtf_ref     [Np, Ep]  one-hot gather of src for forward edges (col k = onehot(u_k))
#   gtr_ref     [Np, Ep]  one-hot gather of src for reverse edges (col k = onehot(v_k))
#   stf_ref     [Ep, Np]  one-hot scatter of dst for forward edges (row k = onehot(v_k))
#   str_ref     [Ep, Np]  one-hot scatter of dst for reverse edges (row k = onehot(u_k))
#   beliefs_ref [2, Np]   output beliefs (class-major, lane-padded)
# ----------------------------------------------------------------------------
def bp_kernel(priors_ref, pot_t_ref, gtf_ref, gtr_ref, stf_ref, str_ref,
              beliefs_ref, *, max_iters, threshold, check_every):
    priors_t = priors_ref[...]                 # [2, Np] f32
    pot_t = pot_t_ref[...]                     # [2, 2]  f32
    Gtf = gtf_ref[...]                         # [Np, Ep] f32 (single resident copy)
    Gtr = gtr_ref[...]                         # [Np, Ep]
    Stf = stf_ref[...]                         # [Ep, Np]
    Str = str_ref[...]                         # [Ep, Np]

    ep = Gtf.shape[1]

    # Loop-invariant 2x2 potential columns (broadcast per class row) — hoisted.
    pc0 = pot_t[:, 0:1]                        # [2, 1] == potential[0, :]
    pc1 = pot_t[:, 1:2]                        # [2, 1] == potential[1, :]

    # Matches the reference: priors must be strictly positive, else log -> -inf.
    log_priors_t = jnp.log(priors_t)           # [2, Np]

    def one_iter(state):
        beliefs_t, mf, mr = state
        # ---- update_messages -------------------------------------------------
        # beliefs[src] for forward (src = u_k) and reverse (src = v_k) halves.
        # NOTE: f32 MXU matmuls lower to multi-pass bf16; the one-hot gather is
        # exact (one nonzero per column), the scatter sum is accumulated in f32.
        gf = jnp.dot(beliefs_t, Gtf, preferred_element_type=jnp.float32)   # [2, Ep]
        gr = jnp.dot(beliefs_t, Gtr, preferred_element_type=jnp.float32)   # [2, Ep]
        # messages[rev_edges]: rev of a forward edge IS its reverse member & v.v.
        rf = gf * pl.reciprocal(mr)                                        # [2, Ep]
        rr = gr * pl.reciprocal(mf)                                        # [2, Ep]
        # 2x2 potential applied on the VPU (no tiny K=2 MXU matmul).
        uf = pc0 * rf[0:1, :] + pc1 * rf[1:2, :]                           # [2, Ep]
        ur = pc0 * rr[0:1, :] + pc1 * rr[1:2, :]                           # [2, Ep]
        nmf = uf * pl.reciprocal(uf[0:1, :] + uf[1:2, :])                  # [2, Ep]
        nmr = ur * pl.reciprocal(ur[0:1, :] + ur[1:2, :])                  # [2, Ep]
        # ---- compute_beliefs: softmax(log(priors) + scatter_add(log(msgs))) ---
        log_b = (log_priors_t
                 + jnp.dot(jnp.log(nmf), Stf, preferred_element_type=jnp.float32)
                 + jnp.dot(jnp.log(nmr), Str, preferred_element_type=jnp.float32))
        mx = jnp.maximum(log_b[0:1, :], log_b[1:2, :])                     # [1, Np]
        e = jnp.exp(log_b - mx)                                            # [2, Np]
        nb = e * pl.reciprocal(e[0:1, :] + e[1:2, :])                      # [2, Np]
        return nb, nmf, nmr

    init_state = (priors_t,
                  jnp.full((2, ep), 0.5, dtype=jnp.float32),
                  jnp.full((2, ep), 0.5, dtype=jnp.float32))

    num_blocks = max_iters // check_every      # check_every divides max_iters

    def cond(carry):
        blk, _, _, _, diff = carry
        return jnp.logical_and(blk < num_blocks, diff >= threshold)

    def body(carry):
        blk, beliefs_t, mf, mr, _ = carry
        old_row0 = beliefs_t[0:1, :]
        # `check_every` iterations per convergence check: amortizes the scalar
        # cross-lane-max round trip and gives the scheduler several iterations
        # of MXU/EUP/XLU work to overlap.
        nb, nmf, nmr = lax.fori_loop(
            0, check_every, lambda _, s: one_iter(s), (beliefs_t, mf, mr),
            unroll=True)
        # Rows sum to 1, so |delta row1| == |delta row0|: row 0 suffices.
        diff = jnp.max(jnp.abs(nb[0:1, :] - old_row0))
        return blk + 1, nb, nmf, nmr, diff

    _, beliefs_f, _, _, _ = lax.while_loop(
        cond, body,
        (jnp.int32(0),) + init_state + (jnp.float32(jnp.inf),))

    beliefs_ref[...] = beliefs_f.astype(beliefs_ref.dtype)


def bp_forward(priors, potential, u_nodes, v_nodes, *,
               max_iters=100, threshold=1e-6):
    """BP forward pass. u_nodes/v_nodes list each undirected edge once as (u_k, v_k)."""
    priors = np.asarray(priors, np.float32)
    potential = np.asarray(potential, np.float32)
    u = np.asarray(u_nodes, np.int64)
    v = np.asarray(v_nodes, np.int64)

    n = priors.shape[0]
    e = u.shape[0]
    assert np.all(priors > 0.0), "priors must be strictly positive (kernel takes log)"

    n_pad = _round_up(max(n, 1), 128)          # lane-dense everywhere
    e_pad = _round_up(max(e, 1), 128)

    # Class-major padded priors; pad nodes get (0.5, 0.5) so everything stays finite.
    priors_t = np.full((2, n_pad), 0.5, np.float32)
    priors_t[:, :n] = priors.T
    pot_t = np.ascontiguousarray(potential.T)

    # One-hot operands, f32 (single resident copy — no bf16 + f32 duplicate).
    ar = np.arange(e)
    gtf = np.zeros((n_pad, e_pad), np.float32); gtf[u, ar] = 1.0
    gtr = np.zeros((n_pad, e_pad), np.float32); gtr[v, ar] = 1.0
    stf = np.zeros((e_pad, n_pad), np.float32); stf[ar, v] = 1.0
    str_ = np.zeros((e_pad, n_pad), np.float32); str_[ar, u] = 1.0
    if e_pad > e:
        # Padded gather columns point at node 0 so padded-lane messages stay finite
        # and positive; padded scatter rows stay all-zero -> no contribution.
        gtf[0, e:] = 1.0
        gtr[0, e:] = 1.0

    # Amortized convergence check: largest convenient divisor of max_iters (<= 8).
    check_every = next(d for d in (8, 5, 4, 3, 2, 1) if max_iters % d == 0)

    # ---- VMEM budget (single invocation, no grid => no double buffering) ------
    onehot_bytes = 4 * (4 * n_pad * e_pad)
    state_bytes = 4 * (2 * n_pad) * 6 + 4 * (2 * e_pad) * 10   # priors/log/beliefs/out + msgs/temps
    needed = onehot_bytes + state_bytes + (4 << 20)            # slack: compiler temps
    try:
        vmem_cap = int(pltpu.get_tpu_info().vmem_capacity_bytes)
    except Exception:                                          # pragma: no cover
        vmem_cap = 64 << 20                                    # conservative fallback
    vmem_budget = int(vmem_cap * 0.85)                         # headroom on every gen
    if needed > vmem_budget:
        # TODO(synk): scalar-prefetched index / streamed path for graphs whose
        #             one-hots exceed the resident-VMEM budget.
        raise NotImplementedError(
            f"graph too large for resident one-hot BP kernel "
            f"(need {needed} B, VMEM budget {vmem_budget} B)")
    vmem_limit = int(min(max(needed, 8 << 20), vmem_budget))

    # Advisory cost estimate (upper bound: max_iters iterations).
    flops = max_iters * (16 * n_pad * e_pad + 40 * e_pad + 24 * n_pad)
    transcendentals = max_iters * (10 * e_pad + 6 * n_pad) + 2 * n_pad
    bytes_accessed = onehot_bytes + 4 * (2 * n_pad) * 2 + 16   # one-hots + priors + out + pot

    kernel = partial(bp_kernel, max_iters=int(max_iters),
                     threshold=float(threshold), check_every=int(check_every))
    out_t = pl.pallas_call(
        kernel,
        out_shape=jax.ShapeDtypeStruct((2, n_pad), jnp.float32),
        in_specs=[pl.BlockSpec(memory_space=pltpu.MemorySpace.VMEM)] * 6,
        out_specs=pl.BlockSpec(memory_space=pltpu.MemorySpace.VMEM),
        compiler_params=pltpu.CompilerParams(vmem_limit_bytes=vmem_limit),
        cost_estimate=pl.CostEstimate(flops=flops,
                                      transcendentals=transcendentals,
                                      bytes_accessed=bytes_accessed),
    )(jnp.asarray(priors_t), jnp.asarray(pot_t), jnp.asarray(gtf),
      jnp.asarray(gtr), jnp.asarray(stf), jnp.asarray(str_))
    return out_t[:, :n].T                                       # [N, 2]


# ----------------------------------------------------------------------------
# Host-side reference mirroring the torch module exactly (coalesce ordering).
# ----------------------------------------------------------------------------
def build_directed_edges(undirected_edges):
    pairs = set()
    for a, b in undirected_edges:
        pairs.add((int(a), int(b)))
        pairs.add((int(b), int(a)))
    pairs = sorted(pairs)                       # == torch sparse coalesce ordering
    src = np.array([p[0] for p in pairs], dtype=np.int64)
    dst = np.array([p[1] for p in pairs], dtype=np.int64)
    return src, dst


def set_rev_edges(src, dst, num_nodes):
    e2 = src.shape[0]
    degrees = np.bincount(src, minlength=num_nodes)
    offsets = np.concatenate([[0], np.cumsum(degrees)[:-1]]).astype(np.int64)
    counts = np.zeros(num_nodes, dtype=np.int64)
    rev = np.zeros(e2, dtype=np.int64)
    for e in range(e2):
        c = dst[e]
        rev[offsets[c] + counts[c]] = e
        counts[c] += 1
    return rev


def ref_forward(priors, potential, src, dst, rev, max_iters=100, threshold=1e-6):
    priors = np.asarray(priors, np.float32)
    potential = np.asarray(potential, np.float32)
    beliefs = priors.copy()
    messages = np.full((src.shape[0], 2), 0.5, dtype=np.float32)
    for _ in range(max_iters):
        old = beliefs
        nb = beliefs[src]
        rm = messages[rev]
        m = (nb / rm) @ potential
        m = m / m.sum(axis=1, keepdims=True)
        lb = np.log(priors).copy()
        np.add.at(lb, dst, np.log(m))
        lb = lb - lb.max(axis=1, keepdims=True)
        e = np.exp(lb)
        beliefs = e / e.sum(axis=1, keepdims=True)
        messages = m
        if np.abs(beliefs - old).max() < threshold:
            break
    return beliefs


if __name__ == "__main__":
    # Small deterministic graph: 8 nodes, 10 undirected edges -> 20 directed.
    num_nodes = 8
    undirected = [(0, 1), (1, 2), (2, 3), (3, 4), (4, 5),
                  (5, 6), (6, 7), (7, 0), (0, 4), (1, 5)]

    # Kernel-side pairing: pair k = (u_k -> v_k) forward, (v_k -> u_k) reverse member.
    pairs = sorted({(min(int(a), int(b)), max(int(a), int(b))) for a, b in undirected})
    u = np.array([p[0] for p in pairs], np.int64)
    v = np.array([p[1] for p in pairs], np.int64)

    # Reference-side: exact torch-module ordering (coalesced directed edges + rev scan).
    src, dst = build_directed_edges(undirected)
    rev = set_rev_edges(src, dst, num_nodes)

    # Potential matrix (potential=0.95), same as the module's __init__.
    pot = 0.95
    potential = np.full((2, 2), (1.0 - pot) / 2.0, dtype=np.float32)
    potential[0, 0] = pot / 2.0
    potential[1, 1] = pot / 2.0

    # Deterministic priors in (0, 1), normalized per node (strictly positive).
    key = jax.random.PRNGKey(0)
    raw = jax.random.uniform(key, (num_nodes, 2), dtype=jnp.float32,
                             minval=0.1, maxval=1.0)
    priors = raw / jnp.sum(raw, axis=1, keepdims=True)

    out = bp_forward(priors, potential, u, v, max_iters=100, threshold=1e-6)
    out = jax.block_until_ready(out)

    ref = ref_forward(np.asarray(priors), potential, src, dst, rev,
                      max_iters=100, threshold=1e-6)
    np.testing.assert_allclose(np.asarray(out), ref, atol=1e-4, rtol=1e-4)

    print("KERNEL_OK")
</pallas_src>

<mosaic_0001>
module attributes {stable_mosaic.version = 11 : i64} {
  func.func @bp_kernel(%arg0: memref<2x128xf32, #tpu.memory_space<vmem>>, %arg1: memref<2x2xf32, #tpu.memory_space<vmem>>, %arg2: memref<128x128xf32, #tpu.memory_space<vmem>>, %arg3: memref<128x128xf32, #tpu.memory_space<vmem>>, %arg4: memref<128x128xf32, #tpu.memory_space<vmem>>, %arg5: memref<128x128xf32, #tpu.memory_space<vmem>>, %arg6: memref<2x128xf32, #tpu.memory_space<vmem>>) attributes {dimension_semantics = [], scalar_prefetch = 0 : i64, scratch_operands = 0 : i64, tpu.core_type = #tpu.core_type<tc>} {
    %c0 = arith.constant 0 : index
    %c0_0 = arith.constant 0 : index
    %0 = vector.load %arg0[%c0, %c0_0] : memref<2x128xf32, #tpu.memory_space<vmem>>, vector<2x128xf32>
    %c0_1 = arith.constant 0 : index
    %c0_2 = arith.constant 0 : index
    %1 = vector.load %arg1[%c0_1, %c0_2] : memref<2x2xf32, #tpu.memory_space<vmem>>, vector<2x2xf32>
    %c0_3 = arith.constant 0 : index
    %c0_4 = arith.constant 0 : index
    %2 = vector.load %arg2[%c0_3, %c0_4] : memref<128x128xf32, #tpu.memory_space<vmem>>, vector<128x128xf32>
    %c0_5 = arith.constant 0 : index
    %c0_6 = arith.constant 0 : index
    %3 = vector.load %arg3[%c0_5, %c0_6] : memref<128x128xf32, #tpu.memory_space<vmem>>, vector<128x128xf32>
    %c0_7 = arith.constant 0 : index
    %c0_8 = arith.constant 0 : index
    %4 = vector.load %arg4[%c0_7, %c0_8] : memref<128x128xf32, #tpu.memory_space<vmem>>, vector<128x128xf32>
    %c0_9 = arith.constant 0 : index
    %c0_10 = arith.constant 0 : index
    %5 = vector.load %arg5[%c0_9, %c0_10] : memref<128x128xf32, #tpu.memory_space<vmem>>, vector<128x128xf32>
    %6 = vector.extract_strided_slice %1 {offsets = [0, 0], sizes = [2, 1], strides = [1, 1]} : vector<2x2xf32> to vector<2x1xf32>
    %7 = vector.extract_strided_slice %1 {offsets = [0, 1], sizes = [2, 1], strides = [1, 1]} : vector<2x2xf32> to vector<2x1xf32>
    %8 = math.log %0 : vector<2x128xf32>
    %cst = arith.constant 5.000000e-01 : f32
    %9 = vector.broadcast %cst : f32 to vector<2x128xf32>
    %cst_11 = arith.constant 5.000000e-01 : f32
    %10 = vector.broadcast %cst_11 : f32 to vector<2x128xf32>
    %c0_i32 = arith.constant 0 : i32
    %cst_12 = arith.constant 0x7F800000 : f32
    %11:5 = scf.while (%arg7 = %c0_i32, %arg8 = %0, %arg9 = %9, %arg10 = %10, %arg11 = %cst_12) : (i32, vector<2x128xf32>, vector<2x128xf32>, vector<2x128xf32>, f32) -> (i32, vector<2x128xf32>, vector<2x128xf32>, vector<2x128xf32>, f32) {
      %c20_i32 = arith.constant 20 : i32
      %13 = arith.cmpi slt, %arg7, %c20_i32 : i32
      %cst_15 = arith.constant 9.99999997E-7 : f32
      %14 = arith.cmpf oge, %arg11, %cst_15 : f32
      %15 = arith.andi %13, %14 : i1
      scf.condition(%15) %arg7, %arg8, %arg9, %arg10, %arg11 : i32, vector<2x128xf32>, vector<2x128xf32>, vector<2x128xf32>, f32
    } do {
    ^bb0(%arg7: i32, %arg8: vector<2x128xf32>, %arg9: vector<2x128xf32>, %arg10: vector<2x128xf32>, %arg11: f32):
      %13 = vector.extract_strided_slice %arg8 {offsets = [0, 0], sizes = [1, 128], strides = [1, 1]} : vector<2x128xf32> to vector<1x128xf32>
      %c0_i32_15 = arith.constant 0 : i32
      %cst_16 = arith.constant dense<0.000000e+00> : vector<2x128xf32>
      %14 = tpu.matmul %arg8, %2, %cst_16 {dimension_numbers = #tpu.dot_dimension_numbers<[1], [0], [0], [1], [0, 0, 1, 1], [], []>} : vector<2x128xf32>, vector<128x128xf32>, vector<2x128xf32> -> vector<2x128xf32>
      %cst_17 = arith.constant dense<0.000000e+00> : vector<2x128xf32>
      %15 = tpu.matmul %arg8, %3, %cst_17 {dimension_numbers = #tpu.dot_dimension_numbers<[1], [0], [0], [1], [0, 0, 1, 1], [], []>} : vector<2x128xf32>, vector<128x128xf32>, vector<2x128xf32> -> vector<2x128xf32>
      %16 = tpu.reciprocal %arg10 : vector<2x128xf32> -> vector<2x128xf32>
      %17 = arith.mulf %14, %16 : vector<2x128xf32>
      %18 = tpu.reciprocal %arg9 : vector<2x128xf32> -> vector<2x128xf32>
      %19 = arith.mulf %15, %18 : vector<2x128xf32>
      %20 = vector.extract_strided_slice %17 {offsets = [0, 0], sizes = [1, 128], strides = [1, 1]} : vector<2x128xf32> to vector<1x128xf32>
      %21 = vector.broadcast %6 : vector<2x1xf32> to vector<2x128xf32>
      %22 = vector.broadcast %20 : vector<1x128xf32> to vector<2x128xf32>
      %23 = arith.mulf %21, %22 : vector<2x128xf32>
      %24 = vector.extract_strided_slice %17 {offsets = [1, 0], sizes = [1, 128], strides = [1, 1]} : vector<2x128xf32> to vector<1x128xf32>
      %25 = vector.broadcast %7 : vector<2x1xf32> to vector<2x128xf32>
      %26 = vector.broadcast %24 : vector<1x128xf32> to vector<2x128xf32>
      %27 = arith.mulf %25, %26 : vector<2x128xf32>
      %28 = arith.addf %23, %27 : vector<2x128xf32>
      %29 = vector.extract_strided_slice %19 {offsets = [0, 0], sizes = [1, 128], strides = [1, 1]} : vector<2x128xf32> to vector<1x128xf32>
      %30 = vector.broadcast %6 : vector<2x1xf32> to vector<2x128xf32>
      %31 = vector.broadcast %29 : vector<1x128xf32> to vector<2x128xf32>
      %32 = arith.mulf %30, %31 : vector<2x128xf32>
      %33 = vector.extract_strided_slice %19 {offsets = [1, 0], sizes = [1, 128], strides = [1, 1]} : vector<2x128xf32> to vector<1x128xf32>
      %34 = vector.broadcast %7 : vector<2x1xf32> to vector<2x128xf32>
      %35 = vector.broadcast %33 : vector<1x128xf32> to vector<2x128xf32>
      %36 = arith.mulf %34, %35 : vector<2x128xf32>
      %37 = arith.addf %32, %36 : vector<2x128xf32>
      %38 = vector.extract_strided_slice %28 {offsets = [0, 0], sizes = [1, 128], strides = [1, 1]} : vector<2x128xf32> to vector<1x128xf32>
      %39 = vector.extract_strided_slice %28 {offsets = [1, 0], sizes = [1, 128], strides = [1, 1]} : vector<2x128xf32> to vector<1x128xf32>
      %40 = arith.addf %38, %39 : vector<1x128xf32>
      %41 = tpu.reciprocal %40 : vector<1x128xf32> -> vector<1x128xf32>
      %42 = vector.broadcast %41 : vector<1x128xf32> to vector<2x128xf32>
      %43 = arith.mulf %28, %42 : vector<2x128xf32>
      %44 = vector.extract_strided_slice %37 {offsets = [0, 0], sizes = [1, 128], strides = [1, 1]} : vector<2x128xf32> to vector<1x128xf32>
      %45 = vector.extract_strided_slice %37 {offsets = [1, 0], sizes = [1, 128], strides = [1, 1]} : vector<2x128xf32> to vector<1x128xf32>
      %46 = arith.addf %44, %45 : vector<1x128xf32>
      %47 = tpu.reciprocal %46 : vector<1x128xf32> -> vector<1x128xf32>
      %48 = vector.broadcast %47 : vector<1x128xf32> to vector<2x128xf32>
      %49 = arith.mulf %37, %48 : vector<2x128xf32>
      %50 = math.log %43 : vector<2x128xf32>
      %cst_18 = arith.constant dense<0.000000e+00> : vector<2x128xf32>
      %51 = tpu.matmul %50, %4, %cst_18 {dimension_numbers = #tpu.dot_dimension_numbers<[1], [0], [0], [1], [0, 0, 1, 1], [], []>} : vector<2x128xf32>, vector<128x128xf32>, vector<2x128xf32> -> vector<2x128xf32>
      %52 = arith.addf %8, %51 : vector<2x128xf32>
      %53 = math.log %49 : vector<2x128xf32>
      %cst_19 = arith.constant dense<0.000000e+00> : vector<2x128xf32>
      %54 = tpu.matmul %53, %5, %cst_19 {dimension_numbers = #tpu.dot_dimension_numbers<[1], [0], [0], [1], [0, 0, 1, 1], [], []>} : vector<2x128xf32>, vector<128x128xf32>, vector<2x128xf32> -> vector<2x128xf32>
      %55 = arith.addf %52, %54 : vector<2x128xf32>
      %56 = vector.extract_strided_slice %55 {offsets = [0, 0], sizes = [1, 128], strides = [1, 1]} : vector<2x128xf32> to vector<1x128xf32>
      %57 = vector.extract_strided_slice %55 {offsets = [1, 0], sizes = [1, 128], strides = [1, 1]} : vector<2x128xf32> to vector<1x128xf32>
      %58 = arith.maximumf %56, %57 : vector<1x128xf32>
      %59 = vector.broadcast %58 : vector<1x128xf32> to vector<2x128xf32>
      %60 = arith.subf %55, %59 : vector<2x128xf32>
      %61 = math.exp %60 : vector<2x128xf32>
      %62 = vector.extract_strided_slice %61 {offsets = [0, 0], sizes = [1, 128], strides = [1, 1]} : vector<2x128xf32> to vector<1x128xf32>
      %63 = vector.extract_strided_slice %61 {offsets = [1, 0], sizes = [1, 128], strides = [1, 1]} : vector<2x128xf32> to vector<1x128xf32>
      %64 = arith.addf %62, %63 : vector<1x128xf32>
      %65 = tpu.reciprocal %64 : vector<1x128xf32> -> vector<1x128xf32>
      %66 = vector.broadcast %65 : vector<1x128xf32> to vector<2x128xf32>
      %67 = arith.mulf %61, %66 : vector<2x128xf32>
      %c1_i32 = arith.constant 1 : i32
      %cst_20 = arith.constant dense<0.000000e+00> : vector<2x128xf32>
      %68 = tpu.matmul %67, %2, %cst_20 {dimension_numbers = #tpu.dot_dimension_numbers<[1], [0], [0], [1], [0, 0, 1, 1], [], []>} : vector<2x128xf32>, vector<128x128xf32>, vector<2x128xf32> -> vector<2x128xf32>
      %cst_21 = arith.constant dense<0.000000e+00> : vector<2x128xf32>
      %69 = tpu.matmul %67, %3, %cst_21 {dimension_numbers = #tpu.dot_dimension_numbers<[1], [0], [0], [1], [0, 0, 1, 1], [], []>} : vector<2x128xf32>, vector<128x128xf32>, vector<2x128xf32> -> vector<2x128xf32>
      %70 = tpu.reciprocal %49 : vector<2x128xf32> -> vector<2x128xf32>
      %71 = arith.mulf %68, %70 : vector<2x128xf32>
      %72 = tpu.reciprocal %43 : vector<2x128xf32> -> vector<2x128xf32>
      %73 = arith.mulf %69, %72 : vector<2x128xf32>
      %74 = vector.extract_strided_slice %71 {offsets = [0, 0], sizes = [1, 128], strides = [1, 1]} : vector<2x128xf32> to vector<1x128xf32>
      %75 = vector.broadcast %6 : vector<2x1xf32> to vector<2x128xf32>
      %76 = vector.broadcast %74 : vector<1x128xf32> to vector<2x128xf32>
      %77 = arith.mulf %75, %76 : vector<2x128xf32>
      %78 = vector.extract_strided_slice %71 {offsets = [1, 0], sizes = [1, 128], strides = [1, 1]} : vector<2x128xf32> to vector<1x128xf32>
      %79 = vector.broadcast %7 : vector<2x1xf32> to vector<2x128xf32>
      %80 = vector.broadcast %78 : vector<1x128xf32> to vector<2x128xf32>
      %81 = arith.mulf %79, %80 : vector<2x128xf32>
      %82 = arith.addf %77, %81 : vector<2x128xf32>
      %83 = vector.extract_strided_slice %73 {offsets = [0, 0], sizes = [1, 128], strides = [1, 1]} : vector<2x128xf32> to vector<1x128xf32>
      %84 = vector.broadcast %6 : vector<2x1xf32> to vector<2x128xf32>
      %85 = vector.broadcast %83 : vector<1x128xf32> to vector<2x128xf32>
      %86 = arith.mulf %84, %85 : vector<2x128xf32>
      %87 = vector.extract_strided_slice %73 {offsets = [1, 0], sizes = [1, 128], strides = [1, 1]} : vector<2x128xf32> to vector<1x128xf32>
      %88 = vector.broadcast %7 : vector<2x1xf32> to vector<2x128xf32>
      %89 = vector.broadcast %87 : vector<1x128xf32> to vector<2x128xf32>
      %90 = arith.mulf %88, %89 : vector<2x128xf32>
      %91 = arith.addf %86, %90 : vector<2x128xf32>
      %92 = vector.extract_strided_slice %82 {offsets = [0, 0], sizes = [1, 128], strides = [1, 1]} : vector<2x128xf32> to vector<1x128xf32>
      %93 = vector.extract_strided_slice %82 {offsets = [1, 0], sizes = [1, 128], strides = [1, 1]} : vector<2x128xf32> to vector<1x128xf32>
      %94 = arith.addf %92, %93 : vector<1x128xf32>
      %95 = tpu.reciprocal %94 : vector<1x128xf32> -> vector<1x128xf32>
      %96 = vector.broadcast %95 : vector<1x128xf32> to vector<2x128xf32>
      %97 = arith.mulf %82, %96 : vector<2x128xf32>
      %98 = vector.extract_strided_slice %91 {offsets = [0, 0], sizes = [1, 128], strides = [1, 1]} : vector<2x128xf32> to vector<1x128xf32>
      %99 = vector.extract_strided_slice %91 {offsets = [1, 0], sizes = [1, 128], strides = [1, 1]} : vector<2x128xf32> to vector<1x128xf32>
      %100 = arith.addf %98, %99 : vector<1x128xf32>
      %101 = tpu.reciprocal %100 : vector<1x128xf32> -> vector<1x128xf32>
      %102 = vector.broadcast %101 : vector<1x128xf32> to vector<2x128xf32>
      %103 = arith.mulf %91, %102 : vector<2x128xf32>
      %104 = math.log %97 : vector<2x128xf32>
      %cst_22 = arith.constant dense<0.000000e+00> : vector<2x128xf32>
      %105 = tpu.matmul %104, %4, %cst_22 {dimension_numbers = #tpu.dot_dimension_numbers<[1], [0], [0], [1], [0, 0, 1, 1], [], []>} : vector<2x128xf32>, vector<128x128xf32>, vector<2x128xf32> -> vector<2x128xf32>
      %106 = arith.addf %8, %105 : vector<2x128xf32>
      %107 = math.log %103 : vector<2x128xf32>
      %cst_23 = arith.constant dense<0.000000e+00> : vector<2x128xf32>
      %108 = tpu.matmul %107, %5, %cst_23 {dimension_numbers = #tpu.dot_dimension_numbers<[1], [0], [0], [1], [0, 0, 1, 1], [], []>} : vector<2x128xf32>, vector<128x128xf32>, vector<2x128xf32> -> vector<2x128xf32>
      %109 = arith.addf %106, %108 : vector<2x128xf32>
      %110 = vector.extract_strided_slice %109 {offsets = [0, 0], sizes = [1, 128], strides = [1, 1]} : vector<2x128xf32> to vector<1x128xf32>
      %111 = vector.extract_strided_slice %109 {offsets = [1, 0], sizes = [1, 128], strides = [1, 1]} : vector<2x128xf32> to vector<1x128xf32>
      %112 = arith.maximumf %110, %111 : vector<1x128xf32>
      %113 = vector.broadcast %112 : vector<1x128xf32> to vector<2x128xf32>
      %114 = arith.subf %109, %113 : vector<2x128xf32>
      %115 = math.exp %114 : vector<2x128xf32>
      %116 = vector.extract_strided_slice %115 {offsets = [0, 0], sizes = [1, 128], strides = [1, 1]} : vector<2x128xf32> to vector<1x128xf32>
      %117 = vector.extract_strided_slice %115 {offsets = [1, 0], sizes = [1, 128], strides = [1, 1]} : vector<2x128xf32> to vector<1x128xf32>
      %118 = arith.addf %116, %117 : vector<1x128xf32>
      %119 = tpu.reciprocal %118 : vector<1x128xf32> -> vector<1x128xf32>
      %120 = vector.broadcast %119 : vector<1x128xf32> to vector<2x128xf32>
      %121 = arith.mulf %115, %120 : vector<2x128xf32>
      %c2_i32 = arith.constant 2 : i32
      %cst_24 = arith.constant dense<0.000000e+00> : vector<2x128xf32>
      %122 = tpu.matmul %121, %2, %cst_24 {dimension_numbers = #tpu.dot_dimension_numbers<[1], [0], [0], [1], [0, 0, 1, 1], [], []>} : vector<2x128xf32>, vector<128x128xf32>, vector<2x128xf32> -> vector<2x128xf32>
      %cst_25 = arith.constant dense<0.000000e+00> : vector<2x128xf32>
      %123 = tpu.matmul %121, %3, %cst_25 {dimension_numbers = #tpu.dot_dimension_numbers<[1], [0], [0], [1], [0, 0, 1, 1], [], []>} : vector<2x128xf32>, vector<128x128xf32>, vector<2x128xf32> -> vector<2x128xf32>
      %124 = tpu.reciprocal %103 : vector<2x128xf32> -> vector<2x128xf32>
      %125 = arith.mulf %122, %124 : vector<2x128xf32>
      %126 = tpu.reciprocal %97 : vector<2x128xf32> -> vector<2x128xf32>
      %127 = arith.mulf %123, %126 : vector<2x128xf32>
      %128 = vector.extract_strided_slice %125 {offsets = [0, 0], sizes = [1, 128], strides = [1, 1]} : vector<2x128xf32> to vector<1x128xf32>
      %129 = vector.broadcast %6 : vector<2x1xf32> to vector<2x128xf32>
      %130 = vector.broadcast %128 : vector<1x128xf32> to vector<2x128xf32>
      %131 = arith.mulf %129, %130 : vector<2x128xf32>
      %132 = vector.extract_strided_slice %125 {offsets = [1, 0], sizes = [1, 128], strides = [1, 1]} : vector<2x128xf32> to vector<1x128xf32>
      %133 = vector.broadcast %7 : vector<2x1xf32> to vector<2x128xf32>
      %134 = vector.broadcast %132 : vector<1x128xf32> to vector<2x128xf32>
      %135 = arith.mulf %133, %134 : vector<2x128xf32>
      %136 = arith.addf %131, %135 : vector<2x128xf32>
      %137 = vector.extract_strided_slice %127 {offsets = [0, 0], sizes = [1, 128], strides = [1, 1]} : vector<2x128xf32> to vector<1x128xf32>
      %138 = vector.broadcast %6 : vector<2x1xf32> to vector<2x128xf32>
      %139 = vector.broadcast %137 : vector<1x128xf32> to vector<2x128xf32>
      %140 = arith.mulf %138, %139 : vector<2x128xf32>
      %141 = vector.extract_strided_slice %127 {offsets = [1, 0], sizes = [1, 128], strides = [1, 1]} : vector<2x128xf32> to vector<1x128xf32>
      %142 = vector.broadcast %7 : vector<2x1xf32> to vector<2x128xf32>
      %143 = vector.broadcast %141 : vector<1x128xf32> to vector<2x128xf32>
      %144 = arith.mulf %142, %143 : vector<2x128xf32>
      %145 = arith.addf %140, %144 : vector<2x128xf32>
      %146 = vector.extract_strided_slice %136 {offsets = [0, 0], sizes = [1, 128], strides = [1, 1]} : vector<2x128xf32> to vector<1x128xf32>
      %147 = vector.extract_strided_slice %136 {offsets = [1, 0], sizes = [1, 128], strides = [1, 1]} : vector<2x128xf32> to vector<1x128xf32>
      %148 = arith.addf %146, %147 : vector<1x128xf32>
      %149 = tpu.reciprocal %148 : vector<1x128xf32> -> vector<1x128xf32>
      %150 = vector.broadcast %149 : vector<1x128xf32> to vector<2x128xf32>
      %151 = arith.mulf %136, %150 : vector<2x128xf32>
      %152 = vector.extract_strided_slice %145 {offsets = [0, 0], sizes = [1, 128], strides = [1, 1]} : vector<2x128xf32> to vector<1x128xf32>
      %153 = vector.extract_strided_slice %145 {offsets = [1, 0], sizes = [1, 128], strides = [1, 1]} : vector<2x128xf32> to vector<1x128xf32>
      %154 = arith.addf %152, %153 : vector<1x128xf32>
      %155 = tpu.reciprocal %154 : vector<1x128xf32> -> vector<1x128xf32>
      %156 = vector.broadcast %155 : vector<1x128xf32> to vector<2x128xf32>
      %157 = arith.mulf %145, %156 : vector<2x128xf32>
      %158 = math.log %151 : vector<2x128xf32>
      %cst_26 = arith.constant dense<0.000000e+00> : vector<2x128xf32>
      %159 = tpu.matmul %158, %4, %cst_26 {dimension_numbers = #tpu.dot_dimension_numbers<[1], [0], [0], [1], [0, 0, 1, 1], [], []>} : vector<2x128xf32>, vector<128x128xf32>, vector<2x128xf32> -> vector<2x128xf32>
      %160 = arith.addf %8, %159 : vector<2x128xf32>
      %161 = math.log %157 : vector<2x128xf32>
      %cst_27 = arith.constant dense<0.000000e+00> : vector<2x128xf32>
      %162 = tpu.matmul %161, %5, %cst_27 {dimension_numbers = #tpu.dot_dimension_numbers<[1], [0], [0], [1], [0, 0, 1, 1], [], []>} : vector<2x128xf32>, vector<128x128xf32>, vector<2x128xf32> -> vector<2x128xf32>
      %163 = arith.addf %160, %162 : vector<2x128xf32>
      %164 = vector.extract_strided_slice %163 {offsets = [0, 0], sizes = [1, 128], strides = [1, 1]} : vector<2x128xf32> to vector<1x128xf32>
      %165 = vector.extract_strided_slice %163 {offsets = [1, 0], sizes = [1, 128], strides = [1, 1]} : vector<2x128xf32> to vector<1x128xf32>
      %166 = arith.maximumf %164, %165 : vector<1x128xf32>
      %167 = vector.broadcast %166 : vector<1x128xf32> to vector<2x128xf32>
      %168 = arith.subf %163, %167 : vector<2x128xf32>
      %169 = math.exp %168 : vector<2x128xf32>
      %170 = vector.extract_strided_slice %169 {offsets = [0, 0], sizes = [1, 128], strides = [1, 1]} : vector<2x128xf32> to vector<1x128xf32>
      %171 = vector.extract_strided_slice %169 {offsets = [1, 0], sizes = [1, 128], strides = [1, 1]} : vector<2x128xf32> to vector<1x128xf32>
      %172 = arith.addf %170, %171 : vector<1x128xf32>
      %173 = tpu.reciprocal %172 : vector<1x128xf32> -> vector<1x128xf32>
      %174 = vector.broadcast %173 : vector<1x128xf32> to vector<2x128xf32>
      %175 = arith.mulf %169, %174 : vector<2x128xf32>
      %c3_i32 = arith.constant 3 : i32
      %cst_28 = arith.constant dense<0.000000e+00> : vector<2x128xf32>
      %176 = tpu.matmul %175, %2, %cst_28 {dimension_numbers = #tpu.dot_dimension_numbers<[1], [0], [0], [1], [0, 0, 1, 1], [], []>} : vector<2x128xf32>, vector<128x128xf32>, vector<2x128xf32> -> vector<2x128xf32>
      %cst_29 = arith.constant dense<0.000000e+00> : vector<2x128xf32>
      %177 = tpu.matmul %175, %3, %cst_29 {dimension_numbers = #tpu.dot_dimension_numbers<[1], [0], [0], [1], [0, 0, 1, 1], [], []>} : vector<2x128xf32>, vector<128x128xf32>, vector<2x128xf32> -> vector<2x128xf32>
      %178 = tpu.reciprocal %157 : vector<2x128xf32> -> vector<2x128xf32>
      %179 = arith.mulf %176, %178 : vector<2x128xf32>
      %180 = tpu.reciprocal %151 : vector<2x128xf32> -> vector<2x128xf32>
      %181 = arith.mulf %177, %180 : vector<2x128xf32>
      %182 = vector.extract_strided_slice %179 {offsets = [0, 0], sizes = [1, 128], strides = [1, 1]} : vector<2x128xf32> to vector<1x128xf32>
      %183 = vector.broadcast %6 : vector<2x1xf32> to vector<2x128xf32>
      %184 = vector.broadcast %182 : vector<1x128xf32> to vector<2x128xf32>
      %185 = arith.mulf %183, %184 : vector<2x128xf32>
      %186 = vector.extract_strided_slice %179 {offsets = [1, 0], sizes = [1, 128], strides = [1, 1]} : vector<2x128xf32> to vector<1x128xf32>
      %187 = vector.broadcast %7 : vector<2x1xf32> to vector<2x128xf32>
      %188 = vector.broadcast %186 : vector<1x128xf32> to vector<2x128xf32>
      %189 = arith.mulf %187, %188 : vector<2x128xf32>
      %190 = arith.addf %185, %189 : vector<2x128xf32>
      %191 = vector.extract_strided_slice %181 {offsets = [0, 0], sizes = [1, 128], strides = [1, 1]} : vector<2x128xf32> to vector<1x128xf32>
      %192 = vector.broadcast %6 : vector<2x1xf32> to vector<2x128xf32>
      %193 = vector.broadcast %191 : vector<1x128xf32> to vector<2x128xf32>
      %194 = arith.mulf %192, %193 : vector<2x128xf32>
      %195 = vector.extract_strided_slice %181 {offsets = [1, 0], sizes = [1, 128], strides = [1, 1]} : vector<2x128xf32> to vector<1x128xf32>
      %196 = vector.broadcast %7 : vector<2x1xf32> to vector<2x128xf32>
      %197 = vector.broadcast %195 : vector<1x128xf32> to vector<2x128xf32>
      %198 = arith.mulf %196, %197 : vector<2x128xf32>
      %199 = arith.addf %194, %198 : vector<2x128xf32>
      %200 = vector.extract_strided_slice %190 {offsets = [0, 0], sizes = [1, 128], strides = [1, 1]} : vector<2x128xf32> to vector<1x128xf32>
      %201 = vector.extract_strided_slice %190 {offsets = [1, 0], sizes = [1, 128], strides = [1, 1]} : vector<2x128xf32> to vector<1x128xf32>
      %202 = arith.addf %200, %201 : vector<1x128xf32>
      %203 = tpu.reciprocal %202 : vector<1x128xf32> -> vector<1x128xf32>
      %204 = vector.broadcast %203 : vector<1x128xf32> to vector<2x128xf32>
      %205 = arith.mulf %190, %204 : vector<2x128xf32>
      %206 = vector.extract_strided_slice %199 {offsets = [0, 0], sizes = [1, 128], strides = [1, 1]} : vector<2x128xf32> to vector<1x128xf32>
      %207 = vector.extract_strided_slice %199 {offsets = [1, 0], sizes = [1, 128], strides = [1, 1]} : vector<2x128xf32> to vector<1x128xf32>
      %208 = arith.addf %206, %207 : vector<1x128xf32>
      %209 = tpu.reciprocal %208 : vector<1x128xf32> -> vector<1x128xf32>
      %210 = vector.broadcast %209 : vector<1x128xf32> to vector<2x128xf32>
      %211 = arith.mulf %199, %210 : vector<2x128xf32>
      %212 = math.log %205 : vector<2x128xf32>
      %cst_30 = arith.constant dense<0.000000e+00> : vector<2x128xf32>
      %213 = tpu.matmul %212, %4, %cst_30 {dimension_numbers = #tpu.dot_dimension_numbers<[1], [0], [0], [1], [0, 0, 1, 1], [], []>} : vector<2x128xf32>, vector<128x128xf32>, vector<2x128xf32> -> vector<2x128xf32>
      %214 = arith.addf %8, %213 : vector<2x128xf32>
      %215 = math.log %211 : vector<2x128xf32>
      %cst_31 = arith.constant dense<0.000000e+00> : vector<2x128xf32>
      %216 = tpu.matmul %215, %5, %cst_31 {dimension_numbers = #tpu.dot_dimension_numbers<[1], [0], [0], [1], [0, 0, 1, 1], [], []>} : vector<2x128xf32>, vector<128x128xf32>, vector<2x128xf32> -> vector<2x128xf32>
      %217 = arith.addf %214, %216 : vector<2x128xf32>
      %218 = vector.extract_strided_slice %217 {offsets = [0, 0], sizes = [1, 128], strides = [1, 1]} : vector<2x128xf32> to vector<1x128xf32>
      %219 = vector.extract_strided_slice %217 {offsets = [1, 0], sizes = [1, 128], strides = [1, 1]} : vector<2x128xf32> to vector<1x128xf32>
      %220 = arith.maximumf %218, %219 : vector<1x128xf32>
      %221 = vector.broadcast %220 : vector<1x128xf32> to vector<2x128xf32>
      %222 = arith.subf %217, %221 : vector<2x128xf32>
      %223 = math.exp %222 : vector<2x128xf32>
      %224 = vector.extract_strided_slice %223 {offsets = [0, 0], sizes = [1, 128], strides = [1, 1]} : vector<2x128xf32> to vector<1x128xf32>
      %225 = vector.extract_strided_slice %223 {offsets = [1, 0], sizes = [1, 128], strides = [1, 1]} : vector<2x128xf32> to vector<1x128xf32>
      %226 = arith.addf %224, %225 : vector<1x128xf32>
      %227 = tpu.reciprocal %226 : vector<1x128xf32> -> vector<1x128xf32>
      %228 = vector.broadcast %227 : vector<1x128xf32> to vector<2x128xf32>
      %229 = arith.mulf %223, %228 : vector<2x128xf32>
      %c4_i32 = arith.constant 4 : i32
      %cst_32 = arith.constant dense<0.000000e+00> : vector<2x128xf32>
      %230 = tpu.matmul %229, %2, %cst_32 {dimension_numbers = #tpu.dot_dimension_numbers<[1], [0], [0], [1], [0, 0, 1, 1], [], []>} : vector<2x128xf32>, vector<128x128xf32>, vector<2x128xf32> -> vector<2x128xf32>
      %cst_33 = arith.constant dense<0.000000e+00> : vector<2x128xf32>
      %231 = tpu.matmul %229, %3, %cst_33 {dimension_numbers = #tpu.dot_dimension_numbers<[1], [0], [0], [1], [0, 0, 1, 1], [], []>} : vector<2x128xf32>, vector<128x128xf32>, vector<2x128xf32> -> vector<2x128xf32>
      %232 = tpu.reciprocal %211 : vector<2x128xf32> -> vector<2x128xf32>
      %233 = arith.mulf %230, %232 : vector<2x128xf32>
      %234 = tpu.reciprocal %205 : vector<2x128xf32> -> vector<2x128xf32>
      %235 = arith.mulf %231, %234 : vector<2x128xf32>
      %236 = vector.extract_strided_slice %233 {offsets = [0, 0], sizes = [1, 128], strides = [1, 1]} : vector<2x128xf32> to vector<1x128xf32>
      %237 = vector.broadcast %6 : vector<2x1xf32> to vector<2x128xf32>
      %238 = vector.broadcast %236 : vector<1x128xf32> to vector<2x128xf32>
      %239 = arith.mulf %237, %238 : vector<2x128xf32>
      %240 = vector.extract_strided_slice %233 {offsets = [1, 0], sizes = [1, 128], strides = [1, 1]} : vector<2x128xf32> to vector<1x128xf32>
      %241 = vector.broadcast %7 : vector<2x1xf32> to vector<2x128xf32>
      %242 = vector.broadcast %240 : vector<1x128xf32> to vector<2x128xf32>
      %243 = arith.mulf %241, %242 : vector<2x128xf32>
      %244 = arith.addf %239, %243 : vector<2x128xf32>
      %245 = vector.extract_strided_slice %235 {offsets = [0, 0], sizes = [1, 128], strides = [1, 1]} : vector<2x128xf32> to vector<1x128xf32>
      %246 = vector.broadcast %6 : vector<2x1xf32> to vector<2x128xf32>
      %247 = vector.broadcast %245 : vector<1x128xf32> to vector<2x128xf32>
      %248 = arith.mulf %246, %247 : vector<2x128xf32>
      %249 = vector.extract_strided_slice %235 {offsets = [1, 0], sizes = [1, 128], strides = [1, 1]} : vector<2x128xf32> to vector<1x128xf32>
      %250 = vector.broadcast %7 : vector<2x1xf32> to vector<2x128xf32>
      %251 = vector.broadcast %249 : vector<1x128xf32> to vector<2x128xf32>
      %252 = arith.mulf %250, %251 : vector<2x128xf32>
      %253 = arith.addf %248, %252 : vector<2x128xf32>
      %254 = vector.extract_strided_slice %244 {offsets = [0, 0], sizes = [1, 128], strides = [1, 1]} : vector<2x128xf32> to vector<1x128xf32>
      %255 = vector.extract_strided_slice %244 {offsets = [1, 0], sizes = [1, 128], strides = [1, 1]} : vector<2x128xf32> to vector<1x128xf32>
      %256 = arith.addf %254, %255 : vector<1x128xf32>
      %257 = tpu.reciprocal %256 : vector<1x128xf32> -> vector<1x128xf32>
      %258 = vector.broadcast %257 : vector<1x128xf32> to vector<2x128xf32>
      %259 = arith.mulf %244, %258 : vector<2x128xf32>
      %260 = vector.extract_strided_slice %253 {offsets = [0, 0], sizes = [1, 128], strides = [1, 1]} : vector<2x128xf32> to vector<1x128xf32>
      %261 = vector.extract_strided_slice %253 {offsets = [1, 0], sizes = [1, 128], strides = [1, 1]} : vector<2x128xf32> to vector<1x128xf32>
      %262 = arith.addf %260, %261 : vector<1x128xf32>
      %263 = tpu.reciprocal %262 : vector<1x128xf32> -> vector<1x128xf32>
      %264 = vector.broadcast %263 : vector<1x128xf32> to vector<2x128xf32>
      %265 = arith.mulf %253, %264 : vector<2x128xf32>
      %266 = math.log %259 : vector<2x128xf32>
      %cst_34 = arith.constant dense<0.000000e+00> : vector<2x128xf32>
      %267 = tpu.matmul %266, %4, %cst_34 {dimension_numbers = #tpu.dot_dimension_numbers<[1], [0], [0], [1], [0, 0, 1, 1], [], []>} : vector<2x128xf32>, vector<128x128xf32>, vector<2x128xf32> -> vector<2x128xf32>
      %268 = arith.addf %8, %267 : vector<2x128xf32>
      %269 = math.log %265 : vector<2x128xf32>
      %cst_35 = arith.constant dense<0.000000e+00> : vector<2x128xf32>
      %270 = tpu.matmul %269, %5, %cst_35 {dimension_numbers = #tpu.dot_dimension_numbers<[1], [0], [0], [1], [0, 0, 1, 1], [], []>} : vector<2x128xf32>, vector<128x128xf32>, vector<2x128xf32> -> vector<2x128xf32>
      %271 = arith.addf %268, %270 : vector<2x128xf32>
      %272 = vector.extract_strided_slice %271 {offsets = [0, 0], sizes = [1, 128], strides = [1, 1]} : vector<2x128xf32> to vector<1x128xf32>
      %273 = vector.extract_strided_slice %271 {offsets = [1, 0], sizes = [1, 128], strides = [1, 1]} : vector<2x128xf32> to vector<1x128xf32>
      %274 = arith.maximumf %272, %273 : vector<1x128xf32>
      %275 = vector.broadcast %274 : vector<1x128xf32> to vector<2x128xf32>
      %276 = arith.subf %271, %275 : vector<2x128xf32>
      %277 = math.exp %276 : vector<2x128xf32>
      %278 = vector.extract_strided_slice %277 {offsets = [0, 0], sizes = [1, 128], strides = [1, 1]} : vector<2x128xf32> to vector<1x128xf32>
      %279 = vector.extract_strided_slice %277 {offsets = [1, 0], sizes = [1, 128], strides = [1, 1]} : vector<2x128xf32> to vector<1x128xf32>
      %280 = arith.addf %278, %279 : vector<1x128xf32>
      %281 = tpu.reciprocal %280 : vector<1x128xf32> -> vector<1x128xf32>
      %282 = vector.broadcast %281 : vector<1x128xf32> to vector<2x128xf32>
      %283 = arith.mulf %277, %282 : vector<2x128xf32>
      %c5_i32 = arith.constant 5 : i32
      %284 = vector.extract_strided_slice %283 {offsets = [0, 0], sizes = [1, 128], strides = [1, 1]} : vector<2x128xf32> to vector<1x128xf32>
      %285 = arith.subf %284, %13 : vector<1x128xf32>
      %286 = math.absf %285 : vector<1x128xf32>
      %287 = vector.shape_cast %286 : vector<1x128xf32> to vector<1x1x128xf32>
      %cst_36 = arith.constant dense<0xFF800000> : vector<1xf32>
      %288 = vector.multi_reduction <maximumf>, %287, %cst_36 [1, 2] : vector<1x1x128xf32> to vector<1xf32>
      %289 = vector.shape_cast %288 : vector<1xf32> to vector<1x1x1xf32>
      %290 = vector.extract %289[0, 0, 0] : f32 from vector<1x1x1xf32>
      %c1_i32_37 = arith.constant 1 : i32
      %291 = arith.addi %arg7, %c1_i32_37 : i32
      scf.yield %291, %283, %259, %265, %290 : i32, vector<2x128xf32>, vector<2x128xf32>, vector<2x128xf32>, f32
    }
    %c0_13 = arith.constant 0 : index
    %c0_14 = arith.constant 0 : index
    %12 = vector.load %arg6[%c0_13, %c0_14] : memref<2x128xf32, #tpu.memory_space<vmem>>, vector<2x128xf32>
    tpu.vector_store %arg6[%c0_13, %c0_14], %11#1 {strides = array<i32>} : memref<2x128xf32, #tpu.memory_space<vmem>>, vector<2x128xf32>,
    return
  }
}

</mosaic_0001>

<llo_original>
// kernel: tpu_custom_call.1
$region0: #{tpu_custom_call.1}
  #allocation0 [shape = 'u32[]', space=smem, size = 0x4, offset = 0x4, fixed_abs, tag = 'smem constant byte address 0x4 - core index']
  #allocation1 [shape = 'u32[144,128]{1,0:T(1,128)}', space=vmem, size = 0x12000, scoped, tag = 'internal scratch']
  %s0 = inlined_call_operand.hbm [shape: f32[2,128], index: 0, kind: input, shape index: {}]
  %s1 = inlined_call_operand.hbm [shape: f32[2,2], index: 1, kind: input, shape index: {}]
  %s2 = inlined_call_operand.hbm [shape: f32[128,128], index: 2, kind: input, shape index: {}]
  %s3 = inlined_call_operand.hbm [shape: f32[128,128], index: 3, kind: input, shape index: {}]
  %s4 = inlined_call_operand.hbm [shape: f32[128,128], index: 4, kind: input, shape index: {}]
  %s5 = inlined_call_operand.hbm [shape: f32[128,128], index: 5, kind: input, shape index: {}]
  %s6 = inlined_call_operand.hbm [shape: f32[2,128], index: 6, kind: output, shape index: {}]
  %s7 = sld [smem:[#allocation0]]
  $region65: #{tpu_custom_call.1} parent=0
    _
  %s9 = ssub.s32 1, %s7
  %s10 = scalar_select 0, %s9, %s7
  $region1: #{tpu_custom_call.1} parent=0
    #allocation2 [shape = 'u8[1024]{0}', space=vmem, size = 0x400, scoped, tag = 'input window, operand 0, single buffered']
    #allocation3 [shape = 's32[1]{0}', space=sflag, size = 0x4, scoped, tag = 'scoped memory for tpu_custom_call.1']
    #allocation4 [shape = 's32[1]{0}', space=sflag, size = 0x4, scoped, tag = 'scoped memory for tpu_custom_call.1']
    #allocation5 [shape = 'u8[1024]{0}', space=vmem, size = 0x400, scoped, tag = 'input window, operand 1, single buffered']
    #allocation6 [shape = 's32[1]{0}', space=sflag, size = 0x4, scoped, tag = 'scoped memory for tpu_custom_call.1']
    #allocation7 [shape = 'u8[65536]{0}', space=vmem, size = 0x10000, scoped, tag = 'input window, operand 2, single buffered']
    #allocation8 [shape = 'u8[65536]{0}', space=vmem, size = 0x10000, scoped, tag = 'input window, operand 3, single buffered']
    #allocation9 [shape = 's32[1]{0}', space=sflag, size = 0x4, scoped, tag = 'scoped memory for tpu_custom_call.1']
    #allocation10 [shape = 'u8[65536]{0}', space=vmem, size = 0x10000, scoped, tag = 'input window, operand 4, single buffered']
    #allocation11 [shape = 'u8[65536]{0}', space=vmem, size = 0x10000, scoped, tag = 'input window, operand 5, single buffered']
    #allocation12 [shape = 's32[1]{0}', space=sflag, size = 0x4, scoped, tag = 'scoped memory for tpu_custom_call.1']
    #allocation13 [shape = 'u8[1024]{0}', space=vmem, size = 0x400, scoped, tag = 'output window, operand 0, single buffered']
    %11 = vsyncpa [#allocation3], 0
    %12 = vsyncpa [#allocation6], 0
    %13 = vsyncpa [#allocation9], 0
    %14 = vsyncpa [#allocation12], 0
    %15 = vsyncpa [#allocation4], 0
    // Predicated region
    $region2: #{tpu_custom_call.1} parent=1 // pred_check
      _
    $region3: #{tpu_custom_call.1} parent=1 // pred_check_branch
      %17 = sbr.rel (0) target = $region5
    $region4: #{tpu_custom_call.1} parent=1 // pred_region
      %s19 = ssub.s32 32, 32
      %20 = vsyncadd [#allocation3], %s19
      %s22 = sshll.u32 [#allocation2], 4
      %s23 = int_to_ptr.vmem [resolvable:$true] %s22
      %25 = dma.hbm_to_vmem [thread:$0]  %s0, 32, %s23, [#allocation3]
    $region5: #{tpu_custom_call.1} parent=1 // pred_fallthru
      _
    // Predicated region
    $region6: #{tpu_custom_call.1} parent=1 // pred_check
      _
    $region7: #{tpu_custom_call.1} parent=1 // pred_check_branch
      %27 = sbr.rel (0) target = $region9
    $region8: #{tpu_custom_call.1} parent=1 // pred_region
      %s29 = ssub.s32 32, 32
      %30 = vsyncadd [#allocation6], %s29
      %s32 = sshll.u32 [#allocation5], 4
      %s33 = int_to_ptr.vmem [resolvable:$true] %s32
      %35 = dma.hbm_to_vmem [thread:$0]  %s1, 32, %s33, [#allocation6]
    $region9: #{tpu_custom_call.1} parent=1 // pred_fallthru
      _
    // Predicated region
    $region10: #{tpu_custom_call.1} parent=1 // pred_check
      _
    $region11: #{tpu_custom_call.1} parent=1 // pred_check_branch
      %37 = sbr.rel (0) target = $region13
    $region12: #{tpu_custom_call.1} parent=1 // pred_region
      %s39 = ssub.s32 2048, 2048
      %40 = vsyncadd [#allocation6], %s39
      %s41 = sshll.u32 [#allocation7], 4
      %s42 = int_to_ptr.vmem [resolvable:$true] %s41
      %47 = dma.hbm_to_vmem [thread:$0]  %s2, 2048, %s42, [#allocation6], 128, 128, 8
    $region13: #{tpu_custom_call.1} parent=1 // pred_fallthru
      _
    // Predicated region
    $region14: #{tpu_custom_call.1} parent=1 // pred_check
      _
    $region15: #{tpu_custom_call.1} parent=1 // pred_check_branch
      %49 = sbr.rel (0) target = $region17
    $region16: #{tpu_custom_call.1} parent=1 // pred_region
      %s51 = ssub.s32 2048, 2048
      %52 = vsyncadd [#allocation9], %s51
      %s53 = sshll.u32 [#allocation8], 4
      %s54 = int_to_ptr.vmem [resolvable:$true] %s53
      %59 = dma.hbm_to_vmem [thread:$0]  %s3, 2048, %s54, [#allocation9], 128, 128, 8
    $region17: #{tpu_custom_call.1} parent=1 // pred_fallthru
      _
    // Predicated region
    $region18: #{tpu_custom_call.1} parent=1 // pred_check
      _
    $region19: #{tpu_custom_call.1} parent=1 // pred_check_branch
      %61 = sbr.rel (0) target = $region21
    $region20: #{tpu_custom_call.1} parent=1 // pred_region
      %s63 = ssub.s32 2048, 2048
      %64 = vsyncadd [#allocation9], %s63
      %s65 = sshll.u32 [#allocation10], 4
      %s66 = int_to_ptr.vmem [resolvable:$true] %s65
      %71 = dma.hbm_to_vmem [thread:$0]  %s4, 2048, %s66, [#allocation9], 128, 128, 8
    $region21: #{tpu_custom_call.1} parent=1 // pred_fallthru
      _
    // Predicated region
    $region22: #{tpu_custom_call.1} parent=1 // pred_check
      _
    $region23: #{tpu_custom_call.1} parent=1 // pred_check_branch
      %73 = sbr.rel (0) target = $region25
    $region24: #{tpu_custom_call.1} parent=1 // pred_region
      %s75 = ssub.s32 2048, 2048
      %76 = vsyncadd [#allocation12], %s75
      %s77 = sshll.u32 [#allocation11], 4
      %s78 = int_to_ptr.vmem [resolvable:$true] %s77
      %83 = dma.hbm_to_vmem [thread:$0]  %s5, 2048, %s78, [#allocation12], 128, 128, 8
    $region25: #{tpu_custom_call.1} parent=1 // pred_fallthru
      _
    // Predicated region
    $region26: #{tpu_custom_call.1} parent=1 // pred_check
      _
    $region27: #{tpu_custom_call.1} parent=1 // pred_check_branch
      %85 = sbr.rel (0) target = $region29
    $region28: #{tpu_custom_call.1} parent=1 // pred_region
      %86 = dma.done [#allocation3], 32
    $region29: #{tpu_custom_call.1} parent=1 // pred_fallthru
      _
    // Predicated region
    $region30: #{tpu_custom_call.1} parent=1 // pred_check
      _
    $region31: #{tpu_custom_call.1} parent=1 // pred_check_branch
      %88 = sbr.rel (0) target = $region33
    $region32: #{tpu_custom_call.1} parent=1 // pred_region
      %89 = dma.done [#allocation6], 32
    $region33: #{tpu_custom_call.1} parent=1 // pred_fallthru
      _
    // Predicated region
    $region34: #{tpu_custom_call.1} parent=1 // pred_check
      _
    $region35: #{tpu_custom_call.1} parent=1 // pred_check_branch
      %91 = sbr.rel (0) target = $region37
    $region36: #{tpu_custom_call.1} parent=1 // pred_region
      %92 = dma.done [#allocation6], 2048
    $region37: #{tpu_custom_call.1} parent=1 // pred_fallthru
      _
    // Predicated region
    $region38: #{tpu_custom_call.1} parent=1 // pred_check
      _
    $region39: #{tpu_custom_call.1} parent=1 // pred_check_branch
      %94 = sbr.rel (0) target = $region41
    $region40: #{tpu_custom_call.1} parent=1 // pred_region
      %95 = dma.done [#allocation9], 2048
    $region41: #{tpu_custom_call.1} parent=1 // pred_fallthru
      _
    // Predicated region
    $region42: #{tpu_custom_call.1} parent=1 // pred_check
      _
    $region43: #{tpu_custom_call.1} parent=1 // pred_check_branch
      %97 = sbr.rel (0) target = $region45
    $region44: #{tpu_custom_call.1} parent=1 // pred_region
      %98 = dma.done [#allocation9], 2048
    $region45: #{tpu_custom_call.1} parent=1 // pred_fallthru
      _
    // Predicated region
    $region46: #{tpu_custom_call.1} parent=1 // pred_check
      _
    $region47: #{tpu_custom_call.1} parent=1 // pred_check_branch
      %100 = sbr.rel (0) target = $region49
    $region48: #{tpu_custom_call.1} parent=1 // pred_region
      %101 = dma.done [#allocation12], 2048
    $region49: #{tpu_custom_call.1} parent=1 // pred_fallthru
      _
    %v102 = vld [vmem:[#allocation2] sm:$0x3]
    %v103 = vld [vmem:[#allocation5] sm:$0x3]
    %v104 = vld [vmem:[#allocation7] sm:$0xff]
    %v105 = vld [vmem:[#allocation7 + $0x8] sm:$0xff]
    %v106 = vld [vmem:[#allocation7 + $0x10] sm:$0xff]
    %v107 = vld [vmem:[#allocation7 + $0x18] sm:$0xff]
    %v108 = vld [vmem:[#allocation7 + $0x20] sm:$0xff]
    %v109 = vld [vmem:[#allocation7 + $0x28] sm:$0xff]
    %v110 = vld [vmem:[#allocation7 + $0x30] sm:$0xff]
    %v111 = vld [vmem:[#allocation7 + $0x38] sm:$0xff]
    %v112 = vld [vmem:[#allocation7 + $0x40] sm:$0xff]
    %v113 = vld [vmem:[#allocation7 + $0x48] sm:$0xff]
    %v114 = vld [vmem:[#allocation7 + $0x50] sm:$0xff]
    %v115 = vld [vmem:[#allocation7 + $0x58] sm:$0xff]
    %v116 = vld [vmem:[#allocation7 + $0x60] sm:$0xff]
    %v117 = vld [vmem:[#allocation7 + $0x68] sm:$0xff]
    %v118 = vld [vmem:[#allocation7 + $0x70] sm:$0xff]
    %v119 = vld [vmem:[#allocation7 + $0x78] sm:$0xff]
    %v120 = vld [vmem:[#allocation8] sm:$0xff]
    %v121 = vld [vmem:[#allocation8 + $0x8] sm:$0xff]
    %v122 = vld [vmem:[#allocation8 + $0x10] sm:$0xff]
    %v123 = vld [vmem:[#allocation8 + $0x18] sm:$0xff]
    %v124 = vld [vmem:[#allocation8 + $0x20] sm:$0xff]
    %v125 = vld [vmem:[#allocation8 + $0x28] sm:$0xff]
    %v126 = vld [vmem:[#allocation8 + $0x30] sm:$0xff]
    %v127 = vld [vmem:[#allocation8 + $0x38] sm:$0xff]
    %v128 = vld [vmem:[#allocation8 + $0x40] sm:$0xff]
    %v129 = vld [vmem:[#allocation8 + $0x48] sm:$0xff]
    %v130 = vld [vmem:[#allocation8 + $0x50] sm:$0xff]
    %v131 = vld [vmem:[#allocation8 + $0x58] sm:$0xff]
    %v132 = vld [vmem:[#allocation8 + $0x60] sm:$0xff]
    %v133 = vld [vmem:[#allocation8 + $0x68] sm:$0xff]
    %v134 = vld [vmem:[#allocation8 + $0x70] sm:$0xff]
    %v135 = vld [vmem:[#allocation8 + $0x78] sm:$0xff]
    %v136 = vld [vmem:[#allocation10] sm:$0xff]
    %v137 = vld [vmem:[#allocation10 + $0x8] sm:$0xff]
    %v138 = vld [vmem:[#allocation10 + $0x10] sm:$0xff]
    %v139 = vld [vmem:[#allocation10 + $0x18] sm:$0xff]
    %v140 = vld [vmem:[#allocation10 + $0x20] sm:$0xff]
    %v141 = vld [vmem:[#allocation10 + $0x28] sm:$0xff]
    %v142 = vld [vmem:[#allocation10 + $0x30] sm:$0xff]
    %v143 = vld [vmem:[#allocation10 + $0x38] sm:$0xff]
    %v144 = vld [vmem:[#allocation10 + $0x40] sm:$0xff]
    %v145 = vld [vmem:[#allocation10 + $0x48] sm:$0xff]
    %v146 = vld [vmem:[#allocation10 + $0x50] sm:$0xff]
    %v147 = vld [vmem:[#allocation10 + $0x58] sm:$0xff]
    %v148 = vld [vmem:[#allocation10 + $0x60] sm:$0xff]
    %v149 = vld [vmem:[#allocation10 + $0x68] sm:$0xff]
    %v150 = vld [vmem:[#allocation10 + $0x70] sm:$0xff]
    %v151 = vld [vmem:[#allocation10 + $0x78] sm:$0xff]
    %v152 = vld [vmem:[#allocation11] sm:$0xff]
    %v153 = vld [vmem:[#allocation11 + $0x8] sm:$0xff]
    %v154 = vld [vmem:[#allocation11 + $0x10] sm:$0xff]
    %v155 = vld [vmem:[#allocation11 + $0x18] sm:$0xff]
    %v156 = vld [vmem:[#allocation11 + $0x20] sm:$0xff]
    %v157 = vld [vmem:[#allocation11 + $0x28] sm:$0xff]
    %v158 = vld [vmem:[#allocation11 + $0x30] sm:$0xff]
    %v159 = vld [vmem:[#allocation11 + $0x38] sm:$0xff]
    %v160 = vld [vmem:[#allocation11 + $0x40] sm:$0xff]
    %v161 = vld [vmem:[#allocation11 + $0x48] sm:$0xff]
    %v162 = vld [vmem:[#allocation11 + $0x50] sm:$0xff]
    %v163 = vld [vmem:[#allocation11 + $0x58] sm:$0xff]
    %v164 = vld [vmem:[#allocation11 + $0x60] sm:$0xff]
    %v165 = vld [vmem:[#allocation11 + $0x68] sm:$0xff]
    %v166 = vld [vmem:[#allocation11 + $0x70] sm:$0xff]
    %v167 = vld [vmem:[#allocation11 + $0x78] sm:$0xff]
    %v168 = vlog2.pop %v102
    %v169 = vmul.f32 %v168, 0.6931472
    // While loop
    $region50: #{tpu_custom_call.1} parent=1 // loop_pre_header
      _
    $region51: #{tpu_custom_call.1} parent=1 // loop_header
      %s171 = sphi 0, %s1969
      %v172 = vphi %v102, %v1955
      %v173 = vphi 0.5, %v1778
      %v174 = vphi 0.5, %v1788
      %s175 = sphi inf, %s1968
      %p176 = scmp.lt.s32.totalorder %s171, 20
      %p177 = scmp.ge.f32.partialorder %s175, 1e-06
      %p178 = pnand %p176, %p177
      %p179 = pneg %p178
    $region52: #{tpu_custom_call.1} parent=1 // loop_header_branch
      %181 = sbr.rel (%p178) target = $region56
    $region53: #{tpu_custom_call.1} parent=1 // loop_body
      %182 = vmatprep.subr.mxu0 0.0
      %183 = vmatpush1.msra.mxu0 %v119
      %184 = vmatprep.subr.mxu0 0.0
      %185 = vmatpush1.msra.mxu0 %v118
      %186 = vmatprep.subr.mxu0 0.0
      %187 = vmatpush1.msra.mxu0 %v117
      %188 = vmatprep.subr.mxu0 0.0
      %189 = vmatpush1.msra.mxu0 %v116
      %190 = vmatprep.subr.mxu0 0.0
      %191 = vmatpush1.msra.mxu0 %v115
      %192 = vmatprep.subr.mxu0 0.0
      %193 = vmatpush1.msra.mxu0 %v114
      %194 = vmatprep.subr.mxu0 0.0
      %195 = vmatpush1.msra.mxu0 %v113
      %196 = vmatprep.subr.mxu0 0.0
      %197 = vmatpush1.msra.mxu0 %v112
      %198 = vmatprep.subr.mxu0 0.0
      %199 = vmatpush1.msra.mxu0 %v111
      %200 = vmatprep.subr.mxu0 0.0
      %201 = vmatpush1.msra.mxu0 %v110
      %202 = vmatprep.subr.mxu0 0.0
      %203 = vmatpush1.msra.mxu0 %v109
      %204 = vmatprep.subr.mxu0 0.0
      %205 = vmatpush1.msra.mxu0 %v108
      %206 = vmatprep.subr.mxu0 0.0
      %207 = vmatpush1.msra.mxu0 %v107
      %208 = vmatprep.subr.mxu0 0.0
      %209 = vmatpush1.msra.mxu0 %v106
      %210 = vmatprep.subr.mxu0 0.0
      %211 = vmatpush1.msra.mxu0 %v105
      %212 = vmatprep.subr.mxu0 0.0
      %213 = vmatpush1.msra.mxu0 %v104
      %214 = vmatprep.subr.mxu0 0.0
      %215 = vmatpush2.msra.mxu0 0.0
      %216 = vmatprep.subr.mxu0 0.0
      %217 = vmatpush2.msra.mxu0 0.0
      %218 = vmatprep.subr.mxu0 0.0
      %219 = vmatpush2.msra.mxu0 0.0
      %220 = vmatprep.subr.mxu0 0.0
      %221 = vmatpush2.msra.mxu0 0.0
      %222 = vmatprep.subr.mxu0 0.0
      %223 = vmatpush2.msra.mxu0 0.0
      %224 = vmatprep.subr.mxu0 0.0
      %225 = vmatpush2.msra.mxu0 0.0
      %226 = vmatprep.subr.mxu0 0.0
      %227 = vmatpush2.msra.mxu0 0.0
      %228 = vmatprep.subr.mxu0 0.0
      %229 = vmatpush2.msra.mxu0 0.0
      %230 = vmatprep.subr.mxu0 0.0
      %231 = vmatpush2.msra.mxu0 0.0
      %232 = vmatprep.subr.mxu0 0.0
      %233 = vmatpush2.msra.mxu0 0.0
      %234 = vmatprep.subr.mxu0 0.0
      %235 = vmatpush2.msra.mxu0 0.0
      %236 = vmatprep.subr.mxu0 0.0
      %237 = vmatpush2.msra.mxu0 0.0
      %238 = vmatprep.subr.mxu0 0.0
      %239 = vmatpush2.msra.mxu0 0.0
      %240 = vmatprep.subr.mxu0 0.0
      %241 = vmatpush2.msra.mxu0 0.0
      %242 = vmatprep.subr.mxu0 0.0
      %243 = vmatpush2.msra.mxu0 0.0
      %244 = vmatprep.subr.mxu0 0.0
      %245 = vmatpush2.msra.mxu0 0.0
      %246 = vmatprep.mubr.f32.mxu0 0.0
      %247 = vmatmul.mubr.f32.gmra.mxu0 %v172
      %v248 = vpop.f32.mrf.mxu0
      %v249 = vadd.f32 0.0, %v248
      %v250 = vpop.f32.mrf.mxu0
      %251 = vdwg.mxu0
      %252 = vmatprep.subr.mxu0 0.0
      %253 = vmatpush1.msra.mxu0 %v135
      %254 = vmatprep.subr.mxu0 0.0
      %255 = vmatpush1.msra.mxu0 %v134
      %256 = vmatprep.subr.mxu0 0.0
      %257 = vmatpush1.msra.mxu0 %v133
      %258 = vmatprep.subr.mxu0 0.0
      %259 = vmatpush1.msra.mxu0 %v132
      %260 = vmatprep.subr.mxu0 0.0
      %261 = vmatpush1.msra.mxu0 %v131
      %262 = vmatprep.subr.mxu0 0.0
      %263 = vmatpush1.msra.mxu0 %v130
      %264 = vmatprep.subr.mxu0 0.0
      %265 = vmatpush1.msra.mxu0 %v129
      %266 = vmatprep.subr.mxu0 0.0
      %267 = vmatpush1.msra.mxu0 %v128
      %268 = vmatprep.subr.mxu0 0.0
      %269 = vmatpush1.msra.mxu0 %v127
      %270 = vmatprep.subr.mxu0 0.0
      %271 = vmatpush1.msra.mxu0 %v126
      %272 = vmatprep.subr.mxu0 0.0
      %273 = vmatpush1.msra.mxu0 %v125
      %274 = vmatprep.subr.mxu0 0.0
      %275 = vmatpush1.msra.mxu0 %v124
      %276 = vmatprep.subr.mxu0 0.0
      %277 = vmatpush1.msra.mxu0 %v123
      %278 = vmatprep.subr.mxu0 0.0
      %279 = vmatpush1.msra.mxu0 %v122
      %280 = vmatprep.subr.mxu0 0.0
      %281 = vmatpush1.msra.mxu0 %v121
      %282 = vmatprep.subr.mxu0 0.0
      %283 = vmatpush1.msra.mxu0 %v120
      %284 = vmatprep.subr.mxu0 0.0
      %285 = vmatpush2.msra.mxu0 0.0
      %286 = vmatprep.subr.mxu0 0.0
      %287 = vmatpush2.msra.mxu0 0.0
      %288 = vmatprep.subr.mxu0 0.0
      %289 = vmatpush2.msra.mxu0 0.0
      %290 = vmatprep.subr.mxu0 0.0
      %291 = vmatpush2.msra.mxu0 0.0
      %292 = vmatprep.subr.mxu0 0.0
      %293 = vmatpush2.msra.mxu0 0.0
      %294 = vmatprep.subr.mxu0 0.0
      %295 = vmatpush2.msra.mxu0 0.0
      %296 = vmatprep.subr.mxu0 0.0
      %297 = vmatpush2.msra.mxu0 0.0
      %298 = vmatprep.subr.mxu0 0.0
      %299 = vmatpush2.msra.mxu0 0.0
      %300 = vmatprep.subr.mxu0 0.0
      %301 = vmatpush2.msra.mxu0 0.0
      %302 = vmatprep.subr.mxu0 0.0
      %303 = vmatpush2.msra.mxu0 0.0
      %304 = vmatprep.subr.mxu0 0.0
      %305 = vmatpush2.msra.mxu0 0.0
      %306 = vmatprep.subr.mxu0 0.0
      %307 = vmatpush2.msra.mxu0 0.0
      %308 = vmatprep.subr.mxu0 0.0
      %309 = vmatpush2.msra.mxu0 0.0
      %310 = vmatprep.subr.mxu0 0.0
      %311 = vmatpush2.msra.mxu0 0.0
      %312 = vmatprep.subr.mxu0 0.0
      %313 = vmatpush2.msra.mxu0 0.0
      %314 = vmatprep.subr.mxu0 0.0
      %315 = vmatpush2.msra.mxu0 0.0
      %316 = vmatprep.mubr.f32.mxu0 0.0
      %317 = vmatmul.mubr.f32.gmra.mxu0 %v172
      %v318 = vpop.f32.mrf.mxu0
      %v319 = vadd.f32 0.0, %v318
      %v320 = vpop.f32.mrf.mxu0
      %321 = vdwg.mxu0
      %v322 = vrcp.pop %v174
      %v323 = vmul.f32 %v249, %v322
      %v324 = vrcp.pop %v173
      %v325 = vmul.f32 %v319, %v324
      %327 = vset.pattern.permute.xlu0 0
      %328 = vperm.xlu0 %327, %v103
      %v329 = vpop.permute.xlu0 %328
      %v331 = vlaneseq
      %v332 = vshrl.u32 %v331, 7
      %v333 = vsub.s32 0, %v332
      %v334 = vrot.slane %v323, %v333
      %v335 = vmul.f32 %v329, %v334
      %336 = vset.pattern.permute.xlu0 1
      %337 = vperm.xlu0 %336, %v103
      %v338 = vpop.permute.xlu0 %337
      %v340 = vlaneseq
      %v341 = vshrl.u32 %v340, 7
      %v342 = vsub.s32 1, %v341
      %v343 = vrot.slane %v323, %v342
      %v344 = vmul.f32 %v338, %v343
      %v345 = vadd.f32 %v335, %v344
      %v346 = vlaneseq
      %v347 = vshrl.u32 %v346, 7
      %v348 = vsub.s32 0, %v347
      %v349 = vrot.slane %v325, %v348
      %v350 = vmul.f32 %v329, %v349
      %v351 = vlaneseq
      %v352 = vshrl.u32 %v351, 7
      %v353 = vsub.s32 1, %v352
      %v354 = vrot.slane %v325, %v353
      %v355 = vmul.f32 %v338, %v354
      %v356 = vadd.f32 %v350, %v355
      %v358 = vrot.slane %v345, 1
      %v360 = vadd.f32 %v345, %v358
      %v361 = vrcp.pop %v360
      %v362 = vlaneseq
      %v363 = vshrl.u32 %v362, 7
      %v364 = vsub.s32 0, %v363
      %v365 = vrot.slane %v361, %v364
      %v366 = vmul.f32 %v345, %v365
      %v368 = vrot.slane %v356, 1
      %v370 = vadd.f32 %v356, %v368
      %v371 = vrcp.pop %v370
      %v372 = vlaneseq
      %v373 = vshrl.u32 %v372, 7
      %v374 = vsub.s32 0, %v373
      %v375 = vrot.slane %v371, %v374
      %v376 = vmul.f32 %v356, %v375
      %v377 = vlog2.pop %v366
      %v378 = vmul.f32 %v377, 0.6931472
      %379 = vmatprep.subr.mxu0 0.0
      %380 = vmatpush1.msra.mxu0 %v151
      %381 = vmatprep.subr.mxu0 0.0
      %382 = vmatpush1.msra.mxu0 %v150
      %383 = vmatprep.subr.mxu0 0.0
      %384 = vmatpush1.msra.mxu0 %v149
      %385 = vmatprep.subr.mxu0 0.0
      %386 = vmatpush1.msra.mxu0 %v148
      %387 = vmatprep.subr.mxu0 0.0
      %388 = vmatpush1.msra.mxu0 %v147
      %389 = vmatprep.subr.mxu0 0.0
      %390 = vmatpush1.msra.mxu0 %v146
      %391 = vmatprep.subr.mxu0 0.0
      %392 = vmatpush1.msra.mxu0 %v145
      %393 = vmatprep.subr.mxu0 0.0
      %394 = vmatpush1.msra.mxu0 %v144
      %395 = vmatprep.subr.mxu0 0.0
      %396 = vmatpush1.msra.mxu0 %v143
      %397 = vmatprep.subr.mxu0 0.0
      %398 = vmatpush1.msra.mxu0 %v142
      %399 = vmatprep.subr.mxu0 0.0
      %400 = vmatpush1.msra.mxu0 %v141
      %401 = vmatprep.subr.mxu0 0.0
      %402 = vmatpush1.msra.mxu0 %v140
      %403 = vmatprep.subr.mxu0 0.0
      %404 = vmatpush1.msra.mxu0 %v139
      %405 = vmatprep.subr.mxu0 0.0
      %406 = vmatpush1.msra.mxu0 %v138
      %407 = vmatprep.subr.mxu0 0.0
      %408 = vmatpush1.msra.mxu0 %v137
      %409 = vmatprep.subr.mxu0 0.0
      %410 = vmatpush1.msra.mxu0 %v136
      %411 = vmatprep.subr.mxu0 0.0
      %412 = vmatpush2.msra.mxu0 0.0
      %413 = vmatprep.subr.mxu0 0.0
      %414 = vmatpush2.msra.mxu0 0.0
      %415 = vmatprep.subr.mxu0 0.0
      %416 = vmatpush2.msra.mxu0 0.0
      %417 = vmatprep.subr.mxu0 0.0
      %418 = vmatpush2.msra.mxu0 0.0
      %419 = vmatprep.subr.mxu0 0.0
      %420 = vmatpush2.msra.mxu0 0.0
      %421 = vmatprep.subr.mxu0 0.0
      %422 = vmatpush2.msra.mxu0 0.0
      %423 = vmatprep.subr.mxu0 0.0
      %424 = vmatpush2.msra.mxu0 0.0
      %425 = vmatprep.subr.mxu0 0.0
      %426 = vmatpush2.msra.mxu0 0.0
      %427 = vmatprep.subr.mxu0 0.0
      %428 = vmatpush2.msra.mxu0 0.0
      %429 = vmatprep.subr.mxu0 0.0
      %430 = vmatpush2.msra.mxu0 0.0
      %431 = vmatprep.subr.mxu0 0.0
      %432 = vmatpush2.msra.mxu0 0.0
      %433 = vmatprep.subr.mxu0 0.0
      %434 = vmatpush2.msra.mxu0 0.0
      %435 = vmatprep.subr.mxu0 0.0
      %436 = vmatpush2.msra.mxu0 0.0
      %437 = vmatprep.subr.mxu0 0.0
      %438 = vmatpush2.msra.mxu0 0.0
      %439 = vmatprep.subr.mxu0 0.0
      %440 = vmatpush2.msra.mxu0 0.0
      %441 = vmatprep.subr.mxu0 0.0
      %442 = vmatpush2.msra.mxu0 0.0
      %443 = vmatprep.mubr.f32.mxu0 0.0
      %444 = vmatmul.mubr.f32.gmra.mxu0 %v378
      %v445 = vpop.f32.mrf.mxu0
      %v446 = vadd.f32 0.0, %v445
      %v447 = vpop.f32.mrf.mxu0
      %448 = vdwg.mxu0
      %v449 = vadd.f32 %v169, %v446
      %v450 = vlog2.pop %v376
      %v451 = vmul.f32 %v450, 0.6931472
      %452 = vmatprep.subr.mxu0 0.0
      %453 = vmatpush1.msra.mxu0 %v167
      %454 = vmatprep.subr.mxu0 0.0
      %455 = vmatpush1.msra.mxu0 %v166
      %456 = vmatprep.subr.mxu0 0.0
      %457 = vmatpush1.msra.mxu0 %v165
      %458 = vmatprep.subr.mxu0 0.0
      %459 = vmatpush1.msra.mxu0 %v164
      %460 = vmatprep.subr.mxu0 0.0
      %461 = vmatpush1.msra.mxu0 %v163
      %462 = vmatprep.subr.mxu0 0.0
      %463 = vmatpush1.msra.mxu0 %v162
      %464 = vmatprep.subr.mxu0 0.0
      %465 = vmatpush1.msra.mxu0 %v161
      %466 = vmatprep.subr.mxu0 0.0
      %467 = vmatpush1.msra.mxu0 %v160
      %468 = vmatprep.subr.mxu0 0.0
      %469 = vmatpush1.msra.mxu0 %v159
      %470 = vmatprep.subr.mxu0 0.0
      %471 = vmatpush1.msra.mxu0 %v158
      %472 = vmatprep.subr.mxu0 0.0
      %473 = vmatpush1.msra.mxu0 %v157
      %474 = vmatprep.subr.mxu0 0.0
      %475 = vmatpush1.msra.mxu0 %v156
      %476 = vmatprep.subr.mxu0 0.0
      %477 = vmatpush1.msra.mxu0 %v155
      %478 = vmatprep.subr.mxu0 0.0
      %479 = vmatpush1.msra.mxu0 %v154
      %480 = vmatprep.subr.mxu0 0.0
      %481 = vmatpush1.msra.mxu0 %v153
      %482 = vmatprep.subr.mxu0 0.0
      %483 = vmatpush1.msra.mxu0 %v152
      %484 = vmatprep.subr.mxu0 0.0
      %485 = vmatpush2.msra.mxu0 0.0
      %486 = vmatprep.subr.mxu0 0.0
      %487 = vmatpush2.msra.mxu0 0.0
      %488 = vmatprep.subr.mxu0 0.0
      %489 = vmatpush2.msra.mxu0 0.0
      %490 = vmatprep.subr.mxu0 0.0
      %491 = vmatpush2.msra.mxu0 0.0
      %492 = vmatprep.subr.mxu0 0.0
      %493 = vmatpush2.msra.mxu0 0.0
      %494 = vmatprep.subr.mxu0 0.0
      %495 = vmatpush2.msra.mxu0 0.0
      %496 = vmatprep.subr.mxu0 0.0
      %497 = vmatpush2.msra.mxu0 0.0
      %498 = vmatprep.subr.mxu0 0.0
      %499 = vmatpush2.msra.mxu0 0.0
      %500 = vmatprep.subr.mxu0 0.0
      %501 = vmatpush2.msra.mxu0 0.0
      %502 = vmatprep.subr.mxu0 0.0
      %503 = vmatpush2.msra.mxu0 0.0
      %504 = vmatprep.subr.mxu0 0.0
      %505 = vmatpush2.msra.mxu0 0.0
      %506 = vmatprep.subr.mxu0 0.0
      %507 = vmatpush2.msra.mxu0 0.0
      %508 = vmatprep.subr.mxu0 0.0
      %509 = vmatpush2.msra.mxu0 0.0
      %510 = vmatprep.subr.mxu0 0.0
      %511 = vmatpush2.msra.mxu0 0.0
      %512 = vmatprep.subr.mxu0 0.0
      %513 = vmatpush2.msra.mxu0 0.0
      %514 = vmatprep.subr.mxu0 0.0
      %515 = vmatpush2.msra.mxu0 0.0
      %516 = vmatprep.mubr.f32.mxu0 0.0
      %517 = vmatmul.mubr.f32.gmra.mxu0 %v451
      %v518 = vpop.f32.mrf.mxu0
      %v519 = vadd.f32 0.0, %v518
      %v520 = vpop.f32.mrf.mxu0
      %521 = vdwg.mxu0
      %v522 = vadd.f32 %v449, %v519
      %v524 = vrot.slane %v522, 1
      %v526 = vmax.f32 %v522, %v524
      %v527 = vlaneseq
      %v528 = vshrl.u32 %v527, 7
      %v529 = vsub.s32 0, %v528
      %v530 = vrot.slane %v526, %v529
      %v531 = vsub.f32 %v522, %v530
      %v532 = vmul.f32 %v531, 1.442695
      %v533 = vpow.pop %v532
      %v535 = vrot.slane %v533, 1
      %v537 = vadd.f32 %v533, %v535
      %v538 = vrcp.pop %v537
      %v539 = vlaneseq
      %v540 = vshrl.u32 %v539, 7
      %v541 = vsub.s32 0, %v540
      %v542 = vrot.slane %v538, %v541
      %v543 = vmul.f32 %v533, %v542
      %544 = vmatprep.subr.mxu0 0.0
      %545 = vmatpush1.msra.mxu0 %v119
      %546 = vmatprep.subr.mxu0 0.0
      %547 = vmatpush1.msra.mxu0 %v118
      %548 = vmatprep.subr.mxu0 0.0
      %549 = vmatpush1.msra.mxu0 %v117
      %550 = vmatprep.subr.mxu0 0.0
      %551 = vmatpush1.msra.mxu0 %v116
      %552 = vmatprep.subr.mxu0 0.0
      %553 = vmatpush1.msra.mxu0 %v115
      %554 = vmatprep.subr.mxu0 0.0
      %555 = vmatpush1.msra.mxu0 %v114
      %556 = vmatprep.subr.mxu0 0.0
      %557 = vmatpush1.msra.mxu0 %v113
      %558 = vmatprep.subr.mxu0 0.0
      %559 = vmatpush1.msra.mxu0 %v112
      %560 = vmatprep.subr.mxu0 0.0
      %561 = vmatpush1.msra.mxu0 %v111
      %562 = vmatprep.subr.mxu0 0.0
      %563 = vmatpush1.msra.mxu0 %v110
      %564 = vmatprep.subr.mxu0 0.0
      %565 = vmatpush1.msra.mxu0 %v109
      %566 = vmatprep.subr.mxu0 0.0
      %567 = vmatpush1.msra.mxu0 %v108
      %568 = vmatprep.subr.mxu0 0.0
      %569 = vmatpush1.msra.mxu0 %v107
      %570 = vmatprep.subr.mxu0 0.0
      %571 = vmatpush1.msra.mxu0 %v106
      %572 = vmatprep.subr.mxu0 0.0
      %573 = vmatpush1.msra.mxu0 %v105
      %574 = vmatprep.subr.mxu0 0.0
      %575 = vmatpush1.msra.mxu0 %v104
      %576 = vmatprep.subr.mxu0 0.0
      %577 = vmatpush2.msra.mxu0 0.0
      %578 = vmatprep.subr.mxu0 0.0
      %579 = vmatpush2.msra.mxu0 0.0
      %580 = vmatprep.subr.mxu0 0.0
      %581 = vmatpush2.msra.mxu0 0.0
      %582 = vmatprep.subr.mxu0 0.0
      %583 = vmatpush2.msra.mxu0 0.0
      %584 = vmatprep.subr.mxu0 0.0
      %585 = vmatpush2.msra.mxu0 0.0
      %586 = vmatprep.subr.mxu0 0.0
      %587 = vmatpush2.msra.mxu0 0.0
      %588 = vmatprep.subr.mxu0 0.0
      %589 = vmatpush2.msra.mxu0 0.0
      %590 = vmatprep.subr.mxu0 0.0
      %591 = vmatpush2.msra.mxu0 0.0
      %592 = vmatprep.subr.mxu0 0.0
      %593 = vmatpush2.msra.mxu0 0.0
      %594 = vmatprep.subr.mxu0 0.0
      %595 = vmatpush2.msra.mxu0 0.0
      %596 = vmatprep.subr.mxu0 0.0
      %597 = vmatpush2.msra.mxu0 0.0
      %598 = vmatprep.subr.mxu0 0.0
      %599 = vmatpush2.msra.mxu0 0.0
      %600 = vmatprep.subr.mxu0 0.0
      %601 = vmatpush2.msra.mxu0 0.0
      %602 = vmatprep.subr.mxu0 0.0
      %603 = vmatpush2.msra.mxu0 0.0
      %604 = vmatprep.subr.mxu0 0.0
      %605 = vmatpush2.msra.mxu0 0.0
      %606 = vmatprep.subr.mxu0 0.0
      %607 = vmatpush2.msra.mxu0 0.0
      %608 = vmatprep.mubr.f32.mxu0 0.0
      %609 = vmatmul.mubr.f32.gmra.mxu0 %v543
      %v610 = vpop.f32.mrf.mxu0
      %v611 = vadd.f32 0.0, %v610
      %v612 = vpop.f32.mrf.mxu0
      %613 = vdwg.mxu0
      %614 = vmatprep.subr.mxu0 0.0
      %615 = vmatpush1.msra.mxu0 %v135
      %616 = vmatprep.subr.mxu0 0.0
      %617 = vmatpush1.msra.mxu0 %v134
      %618 = vmatprep.subr.mxu0 0.0
      %619 = vmatpush1.msra.mxu0 %v133
      %620 = vmatprep.subr.mxu0 0.0
      %621 = vmatpush1.msra.mxu0 %v132
      %622 = vmatprep.subr.mxu0 0.0
      %623 = vmatpush1.msra.mxu0 %v131
      %624 = vmatprep.subr.mxu0 0.0
      %625 = vmatpush1.msra.mxu0 %v130
      %626 = vmatprep.subr.mxu0 0.0
      %627 = vmatpush1.msra.mxu0 %v129
      %628 = vmatprep.subr.mxu0 0.0
      %629 = vmatpush1.msra.mxu0 %v128
      %630 = vmatprep.subr.mxu0 0.0
      %631 = vmatpush1.msra.mxu0 %v127
      %632 = vmatprep.subr.mxu0 0.0
      %633 = vmatpush1.msra.mxu0 %v126
      %634 = vmatprep.subr.mxu0 0.0
      %635 = vmatpush1.msra.mxu0 %v125
      %636 = vmatprep.subr.mxu0 0.0
      %637 = vmatpush1.msra.mxu0 %v124
      %638 = vmatprep.subr.mxu0 0.0
      %639 = vmatpush1.msra.mxu0 %v123
      %640 = vmatprep.subr.mxu0 0.0
      %641 = vmatpush1.msra.mxu0 %v122
      %642 = vmatprep.subr.mxu0 0.0
      %643 = vmatpush1.msra.mxu0 %v121
      %644 = vmatprep.subr.mxu0 0.0
      %645 = vmatpush1.msra.mxu0 %v120
      %646 = vmatprep.subr.mxu0 0.0
      %647 = vmatpush2.msra.mxu0 0.0
      %648 = vmatprep.subr.mxu0 0.0
      %649 = vmatpush2.msra.mxu0 0.0
      %650 = vmatprep.subr.mxu0 0.0
      %651 = vmatpush2.msra.mxu0 0.0
      %652 = vmatprep.subr.mxu0 0.0
      %653 = vmatpush2.msra.mxu0 0.0
      %654 = vmatprep.subr.mxu0 0.0
      %655 = vmatpush2.msra.mxu0 0.0
      %656 = vmatprep.subr.mxu0 0.0
      %657 = vmatpush2.msra.mxu0 0.0
      %658 = vmatprep.subr.mxu0 0.0
      %659 = vmatpush2.msra.mxu0 0.0
      %660 = vmatprep.subr.mxu0 0.0
      %661 = vmatpush2.msra.mxu0 0.0
      %662 = vmatprep.subr.mxu0 0.0
      %663 = vmatpush2.msra.mxu0 0.0
      %664 = vmatprep.subr.mxu0 0.0
      %665 = vmatpush2.msra.mxu0 0.0
      %666 = vmatprep.subr.mxu0 0.0
      %667 = vmatpush2.msra.mxu0 0.0
      %668 = vmatprep.subr.mxu0 0.0
      %669 = vmatpush2.msra.mxu0 0.0
      %670 = vmatprep.subr.mxu0 0.0
      %671 = vmatpush2.msra.mxu0 0.0
      %672 = vmatprep.subr.mxu0 0.0
      %673 = vmatpush2.msra.mxu0 0.0
      %674 = vmatprep.subr.mxu0 0.0
      %675 = vmatpush2.msra.mxu0 0.0
      %676 = vmatprep.subr.mxu0 0.0
      %677 = vmatpush2.msra.mxu0 0.0
      %678 = vmatprep.mubr.f32.mxu0 0.0
      %679 = vmatmul.mubr.f32.gmra.mxu0 %v543
      %v680 = vpop.f32.mrf.mxu0
      %v681 = vadd.f32 0.0, %v680
      %v682 = vpop.f32.mrf.mxu0
      %683 = vdwg.mxu0
      %v684 = vrcp.pop %v376
      %v685 = vmul.f32 %v611, %v684
      %v686 = vrcp.pop %v366
      %v687 = vmul.f32 %v681, %v686
      %v688 = vlaneseq
      %v689 = vshrl.u32 %v688, 7
      %v690 = vsub.s32 0, %v689
      %v691 = vrot.slane %v685, %v690
      %v692 = vmul.f32 %v329, %v691
      %v693 = vlaneseq
      %v694 = vshrl.u32 %v693, 7
      %v695 = vsub.s32 1, %v694
      %v696 = vrot.slane %v685, %v695
      %v697 = vmul.f32 %v338, %v696
      %v698 = vadd.f32 %v692, %v697
      %v699 = vlaneseq
      %v700 = vshrl.u32 %v699, 7
      %v701 = vsub.s32 0, %v700
      %v702 = vrot.slane %v687, %v701
      %v703 = vmul.f32 %v329, %v702
      %v704 = vlaneseq
      %v705 = vshrl.u32 %v704, 7
      %v706 = vsub.s32 1, %v705
      %v707 = vrot.slane %v687, %v706
      %v708 = vmul.f32 %v338, %v707
      %v709 = vadd.f32 %v703, %v708
      %v711 = vrot.slane %v698, 1
      %v713 = vadd.f32 %v698, %v711
      %v714 = vrcp.pop %v713
      %v715 = vlaneseq
      %v716 = vshrl.u32 %v715, 7
      %v717 = vsub.s32 0, %v716
      %v718 = vrot.slane %v714, %v717
      %v719 = vmul.f32 %v698, %v718
      %v721 = vrot.slane %v709, 1
      %v723 = vadd.f32 %v709, %v721
      %v724 = vrcp.pop %v723
      %v725 = vlaneseq
      %v726 = vshrl.u32 %v725, 7
      %v727 = vsub.s32 0, %v726
      %v728 = vrot.slane %v724, %v727
      %v729 = vmul.f32 %v709, %v728
      %v730 = vlog2.pop %v719
      %v731 = vmul.f32 %v730, 0.6931472
      %732 = vmatprep.subr.mxu0 0.0
      %733 = vmatpush1.msra.mxu0 %v151
      %734 = vmatprep.subr.mxu0 0.0
      %735 = vmatpush1.msra.mxu0 %v150
      %736 = vmatprep.subr.mxu0 0.0
      %737 = vmatpush1.msra.mxu0 %v149
      %738 = vmatprep.subr.mxu0 0.0
      %739 = vmatpush1.msra.mxu0 %v148
      %740 = vmatprep.subr.mxu0 0.0
      %741 = vmatpush1.msra.mxu0 %v147
      %742 = vmatprep.subr.mxu0 0.0
      %743 = vmatpush1.msra.mxu0 %v146
      %744 = vmatprep.subr.mxu0 0.0
      %745 = vmatpush1.msra.mxu0 %v145
      %746 = vmatprep.subr.mxu0 0.0
      %747 = vmatpush1.msra.mxu0 %v144
      %748 = vmatprep.subr.mxu0 0.0
      %749 = vmatpush1.msra.mxu0 %v143
      %750 = vmatprep.subr.mxu0 0.0
      %751 = vmatpush1.msra.mxu0 %v142
      %752 = vmatprep.subr.mxu0 0.0
      %753 = vmatpush1.msra.mxu0 %v141
      %754 = vmatprep.subr.mxu0 0.0
      %755 = vmatpush1.msra.mxu0 %v140
      %756 = vmatprep.subr.mxu0 0.0
      %757 = vmatpush1.msra.mxu0 %v139
      %758 = vmatprep.subr.mxu0 0.0
      %759 = vmatpush1.msra.mxu0 %v138
      %760 = vmatprep.subr.mxu0 0.0
      %761 = vmatpush1.msra.mxu0 %v137
      %762 = vmatprep.subr.mxu0 0.0
      %763 = vmatpush1.msra.mxu0 %v136
      %764 = vmatprep.subr.mxu0 0.0
      %765 = vmatpush2.msra.mxu0 0.0
      %766 = vmatprep.subr.mxu0 0.0
      %767 = vmatpush2.msra.mxu0 0.0
      %768 = vmatprep.subr.mxu0 0.0
      %769 = vmatpush2.msra.mxu0 0.0
      %770 = vmatprep.subr.mxu0 0.0
      %771 = vmatpush2.msra.mxu0 0.0
      %772 = vmatprep.subr.mxu0 0.0
      %773 = vmatpush2.msra.mxu0 0.0
      %774 = vmatprep.subr.mxu0 0.0
      %775 = vmatpush2.msra.mxu0 0.0
      %776 = vmatprep.subr.mxu0 0.0
      %777 = vmatpush2.msra.mxu0 0.0
      %778 = vmatprep.subr.mxu0 0.0
      %779 = vmatpush2.msra.mxu0 0.0
      %780 = vmatprep.subr.mxu0 0.0
      %781 = vmatpush2.msra.mxu0 0.0
      %782 = vmatprep.subr.mxu0 0.0
      %783 = vmatpush2.msra.mxu0 0.0
      %784 = vmatprep.subr.mxu0 0.0
      %785 = vmatpush2.msra.mxu0 0.0
      %786 = vmatprep.subr.mxu0 0.0
      %787 = vmatpush2.msra.mxu0 0.0
      %788 = vmatprep.subr.mxu0 0.0
      %789 = vmatpush2.msra.mxu0 0.0
      %790 = vmatprep.subr.mxu0 0.0
      %791 = vmatpush2.msra.mxu0 0.0
      %792 = vmatprep.subr.mxu0 0.0
      %793 = vmatpush2.msra.mxu0 0.0
      %794 = vmatprep.subr.mxu0 0.0
      %795 = vmatpush2.msra.mxu0 0.0
      %796 = vmatprep.mubr.f32.mxu0 0.0
      %797 = vmatmul.mubr.f32.gmra.mxu0 %v731
      %v798 = vpop.f32.mrf.mxu0
      %v799 = vadd.f32 0.0, %v798
      %v800 = vpop.f32.mrf.mxu0
      %801 = vdwg.mxu0
      %v802 = vadd.f32 %v169, %v799
      %v803 = vlog2.pop %v729
      %v804 = vmul.f32 %v803, 0.6931472
      %805 = vmatprep.subr.mxu0 0.0
      %806 = vmatpush1.msra.mxu0 %v167
      %807 = vmatprep.subr.mxu0 0.0
      %808 = vmatpush1.msra.mxu0 %v166
      %809 = vmatprep.subr.mxu0 0.0
      %810 = vmatpush1.msra.mxu0 %v165
      %811 = vmatprep.subr.mxu0 0.0
      %812 = vmatpush1.msra.mxu0 %v164
      %813 = vmatprep.subr.mxu0 0.0
      %814 = vmatpush1.msra.mxu0 %v163
      %815 = vmatprep.subr.mxu0 0.0
      %816 = vmatpush1.msra.mxu0 %v162
      %817 = vmatprep.subr.mxu0 0.0
      %818 = vmatpush1.msra.mxu0 %v161
      %819 = vmatprep.subr.mxu0 0.0
      %820 = vmatpush1.msra.mxu0 %v160
      %821 = vmatprep.subr.mxu0 0.0
      %822 = vmatpush1.msra.mxu0 %v159
      %823 = vmatprep.subr.mxu0 0.0
      %824 = vmatpush1.msra.mxu0 %v158
      %825 = vmatprep.subr.mxu0 0.0
      %826 = vmatpush1.msra.mxu0 %v157
      %827 = vmatprep.subr.mxu0 0.0
      %828 = vmatpush1.msra.mxu0 %v156
      %829 = vmatprep.subr.mxu0 0.0
      %830 = vmatpush1.msra.mxu0 %v155
      %831 = vmatprep.subr.mxu0 0.0
      %832 = vmatpush1.msra.mxu0 %v154
      %833 = vmatprep.subr.mxu0 0.0
      %834 = vmatpush1.msra.mxu0 %v153
      %835 = vmatprep.subr.mxu0 0.0
      %836 = vmatpush1.msra.mxu0 %v152
      %837 = vmatprep.subr.mxu0 0.0
      %838 = vmatpush2.msra.mxu0 0.0
      %839 = vmatprep.subr.mxu0 0.0
      %840 = vmatpush2.msra.mxu0 0.0
      %841 = vmatprep.subr.mxu0 0.0
      %842 = vmatpush2.msra.mxu0 0.0
      %843 = vmatprep.subr.mxu0 0.0
      %844 = vmatpush2.msra.mxu0 0.0
      %845 = vmatprep.subr.mxu0 0.0
      %846 = vmatpush2.msra.mxu0 0.0
      %847 = vmatprep.subr.mxu0 0.0
      %848 = vmatpush2.msra.mxu0 0.0
      %849 = vmatprep.subr.mxu0 0.0
      %850 = vmatpush2.msra.mxu0 0.0
      %851 = vmatprep.subr.mxu0 0.0
      %852 = vmatpush2.msra.mxu0 0.0
      %853 = vmatprep.subr.mxu0 0.0
      %854 = vmatpush2.msra.mxu0 0.0
      %855 = vmatprep.subr.mxu0 0.0
      %856 = vmatpush2.msra.mxu0 0.0
      %857 = vmatprep.subr.mxu0 0.0
      %858 = vmatpush2.msra.mxu0 0.0
      %859 = vmatprep.subr.mxu0 0.0
      %860 = vmatpush2.msra.mxu0 0.0
      %861 = vmatprep.subr.mxu0 0.0
      %862 = vmatpush2.msra.mxu0 0.0
      %863 = vmatprep.subr.mxu0 0.0
      %864 = vmatpush2.msra.mxu0 0.0
      %865 = vmatprep.subr.mxu0 0.0
      %866 = vmatpush2.msra.mxu0 0.0
      %867 = vmatprep.subr.mxu0 0.0
      %868 = vmatpush2.msra.mxu0 0.0
      %869 = vmatprep.mubr.f32.mxu0 0.0
      %870 = vmatmul.mubr.f32.gmra.mxu0 %v804
      %v871 = vpop.f32.mrf.mxu0
      %v872 = vadd.f32 0.0, %v871
      %v873 = vpop.f32.mrf.mxu0
      %874 = vdwg.mxu0
      %v875 = vadd.f32 %v802, %v872
      %v877 = vrot.slane %v875, 1
      %v879 = vmax.f32 %v875, %v877
      %v880 = vlaneseq
      %v881 = vshrl.u32 %v880, 7
      %v882 = vsub.s32 0, %v881
      %v883 = vrot.slane %v879, %v882
      %v884 = vsub.f32 %v875, %v883
      %v885 = vmul.f32 %v884, 1.442695
      %v886 = vpow.pop %v885
      %v888 = vrot.slane %v886, 1
      %v890 = vadd.f32 %v886, %v888
      %v891 = vrcp.pop %v890
      %v892 = vlaneseq
      %v893 = vshrl.u32 %v892, 7
      %v894 = vsub.s32 0, %v893
      %v895 = vrot.slane %v891, %v894
      %v896 = vmul.f32 %v886, %v895
      %897 = vmatprep.subr.mxu0 0.0
      %898 = vmatpush1.msra.mxu0 %v119
      %899 = vmatprep.subr.mxu0 0.0
      %900 = vmatpush1.msra.mxu0 %v118
      %901 = vmatprep.subr.mxu0 0.0
      %902 = vmatpush1.msra.mxu0 %v117
      %903 = vmatprep.subr.mxu0 0.0
      %904 = vmatpush1.msra.mxu0 %v116
      %905 = vmatprep.subr.mxu0 0.0
      %906 = vmatpush1.msra.mxu0 %v115
      %907 = vmatprep.subr.mxu0 0.0
      %908 = vmatpush1.msra.mxu0 %v114
      %909 = vmatprep.subr.mxu0 0.0
      %910 = vmatpush1.msra.mxu0 %v113
      %911 = vmatprep.subr.mxu0 0.0
      %912 = vmatpush1.msra.mxu0 %v112
      %913 = vmatprep.subr.mxu0 0.0
      %914 = vmatpush1.msra.mxu0 %v111
      %915 = vmatprep.subr.mxu0 0.0
      %916 = vmatpush1.msra.mxu0 %v110
      %917 = vmatprep.subr.mxu0 0.0
      %918 = vmatpush1.msra.mxu0 %v109
      %919 = vmatprep.subr.mxu0 0.0
      %920 = vmatpush1.msra.mxu0 %v108
      %921 = vmatprep.subr.mxu0 0.0
      %922 = vmatpush1.msra.mxu0 %v107
      %923 = vmatprep.subr.mxu0 0.0
      %924 = vmatpush1.msra.mxu0 %v106
      %925 = vmatprep.subr.mxu0 0.0
      %926 = vmatpush1.msra.mxu0 %v105
      %927 = vmatprep.subr.mxu0 0.0
      %928 = vmatpush1.msra.mxu0 %v104
      %929 = vmatprep.subr.mxu0 0.0
      %930 = vmatpush2.msra.mxu0 0.0
      %931 = vmatprep.subr.mxu0 0.0
      %932 = vmatpush2.msra.mxu0 0.0
      %933 = vmatprep.subr.mxu0 0.0
      %934 = vmatpush2.msra.mxu0 0.0
      %935 = vmatprep.subr.mxu0 0.0
      %936 = vmatpush2.msra.mxu0 0.0
      %937 = vmatprep.subr.mxu0 0.0
      %938 = vmatpush2.msra.mxu0 0.0
      %939 = vmatprep.subr.mxu0 0.0
      %940 = vmatpush2.msra.mxu0 0.0
      %941 = vmatprep.subr.mxu0 0.0
      %942 = vmatpush2.msra.mxu0 0.0
      %943 = vmatprep.subr.mxu0 0.0
      %944 = vmatpush2.msra.mxu0 0.0
      %945 = vmatprep.subr.mxu0 0.0
      %946 = vmatpush2.msra.mxu0 0.0
      %947 = vmatprep.subr.mxu0 0.0
      %948 = vmatpush2.msra.mxu0 0.0
      %949 = vmatprep.subr.mxu0 0.0
      %950 = vmatpush2.msra.mxu0 0.0
      %951 = vmatprep.subr.mxu0 0.0
      %952 = vmatpush2.msra.mxu0 0.0
      %953 = vmatprep.subr.mxu0 0.0
      %954 = vmatpush2.msra.mxu0 0.0
      %955 = vmatprep.subr.mxu0 0.0
      %956 = vmatpush2.msra.mxu0 0.0
      %957 = vmatprep.subr.mxu0 0.0
      %958 = vmatpush2.msra.mxu0 0.0
      %959 = vmatprep.subr.mxu0 0.0
      %960 = vmatpush2.msra.mxu0 0.0
      %961 = vmatprep.mubr.f32.mxu0 0.0
      %962 = vmatmul.mubr.f32.gmra.mxu0 %v896
      %v963 = vpop.f32.mrf.mxu0
      %v964 = vadd.f32 0.0, %v963
      %v965 = vpop.f32.mrf.mxu0
      %966 = vdwg.mxu0
      %967 = vmatprep.subr.mxu0 0.0
      %968 = vmatpush1.msra.mxu0 %v135
      %969 = vmatprep.subr.mxu0 0.0
      %970 = vmatpush1.msra.mxu0 %v134
      %971 = vmatprep.subr.mxu0 0.0
      %972 = vmatpush1.msra.mxu0 %v133
      %973 = vmatprep.subr.mxu0 0.0
      %974 = vmatpush1.msra.mxu0 %v132
      %975 = vmatprep.subr.mxu0 0.0
      %976 = vmatpush1.msra.mxu0 %v131
      %977 = vmatprep.subr.mxu0 0.0
      %978 = vmatpush1.msra.mxu0 %v130
      %979 = vmatprep.subr.mxu0 0.0
      %980 = vmatpush1.msra.mxu0 %v129
      %981 = vmatprep.subr.mxu0 0.0
      %982 = vmatpush1.msra.mxu0 %v128
      %983 = vmatprep.subr.mxu0 0.0
      %984 = vmatpush1.msra.mxu0 %v127
      %985 = vmatprep.subr.mxu0 0.0
      %986 = vmatpush1.msra.mxu0 %v126
      %987 = vmatprep.subr.mxu0 0.0
      %988 = vmatpush1.msra.mxu0 %v125
      %989 = vmatprep.subr.mxu0 0.0
      %990 = vmatpush1.msra.mxu0 %v124
      %991 = vmatprep.subr.mxu0 0.0
      %992 = vmatpush1.msra.mxu0 %v123
      %993 = vmatprep.subr.mxu0 0.0
      %994 = vmatpush1.msra.mxu0 %v122
      %995 = vmatprep.subr.mxu0 0.0
      %996 = vmatpush1.msra.mxu0 %v121
      %997 = vmatprep.subr.mxu0 0.0
      %998 = vmatpush1.msra.mxu0 %v120
      %999 = vmatprep.subr.mxu0 0.0
      %1000 = vmatpush2.msra.mxu0 0.0
      %1001 = vmatprep.subr.mxu0 0.0
      %1002 = vmatpush2.msra.mxu0 0.0
      %1003 = vmatprep.subr.mxu0 0.0
      %1004 = vmatpush2.msra.mxu0 0.0
      %1005 = vmatprep.subr.mxu0 0.0
      %1006 = vmatpush2.msra.mxu0 0.0
      %1007 = vmatprep.subr.mxu0 0.0
      %1008 = vmatpush2.msra.mxu0 0.0
      %1009 = vmatprep.subr.mxu0 0.0
      %1010 = vmatpush2.msra.mxu0 0.0
      %1011 = vmatprep.subr.mxu0 0.0
      %1012 = vmatpush2.msra.mxu0 0.0
      %1013 = vmatprep.subr.mxu0 0.0
      %1014 = vmatpush2.msra.mxu0 0.0
      %1015 = vmatprep.subr.mxu0 0.0
      %1016 = vmatpush2.msra.mxu0 0.0
      %1017 = vmatprep.subr.mxu0 0.0
      %1018 = vmatpush2.msra.mxu0 0.0
      %1019 = vmatprep.subr.mxu0 0.0
      %1020 = vmatpush2.msra.mxu0 0.0
      %1021 = vmatprep.subr.mxu0 0.0
      %1022 = vmatpush2.msra.mxu0 0.0
      %1023 = vmatprep.subr.mxu0 0.0
      %1024 = vmatpush2.msra.mxu0 0.0
      %1025 = vmatprep.subr.mxu0 0.0
      %1026 = vmatpush2.msra.mxu0 0.0
      %1027 = vmatprep.subr.mxu0 0.0
      %1028 = vmatpush2.msra.mxu0 0.0
      %1029 = vmatprep.subr.mxu0 0.0
      %1030 = vmatpush2.msra.mxu0 0.0
      %1031 = vmatprep.mubr.f32.mxu0 0.0
      %1032 = vmatmul.mubr.f32.gmra.mxu0 %v896
      %v1033 = vpop.f32.mrf.mxu0
      %v1034 = vadd.f32 0.0, %v1033
      %v1035 = vpop.f32.mrf.mxu0
      %1036 = vdwg.mxu0
      %v1037 = vrcp.pop %v729
      %v1038 = vmul.f32 %v964, %v1037
      %v1039 = vrcp.pop %v719
      %v1040 = vmul.f32 %v1034, %v1039
      %v1041 = vlaneseq
      %v1042 = vshrl.u32 %v1041, 7
      %v1043 = vsub.s32 0, %v1042
      %v1044 = vrot.slane %v1038, %v1043
      %v1045 = vmul.f32 %v329, %v1044
      %v1046 = vlaneseq
      %v1047 = vshrl.u32 %v1046, 7
      %v1048 = vsub.s32 1, %v1047
      %v1049 = vrot.slane %v1038, %v1048
      %v1050 = vmul.f32 %v338, %v1049
      %v1051 = vadd.f32 %v1045, %v1050
      %v1052 = vlaneseq
      %v1053 = vshrl.u32 %v1052, 7
      %v1054 = vsub.s32 0, %v1053
      %v1055 = vrot.slane %v1040, %v1054
      %v1056 = vmul.f32 %v329, %v1055
      %v1057 = vlaneseq
      %v1058 = vshrl.u32 %v1057, 7
      %v1059 = vsub.s32 1, %v1058
      %v1060 = vrot.slane %v1040, %v1059
      %v1061 = vmul.f32 %v338, %v1060
      %v1062 = vadd.f32 %v1056, %v1061
      %v1064 = vrot.slane %v1051, 1
      %v1066 = vadd.f32 %v1051, %v1064
      %v1067 = vrcp.pop %v1066
      %v1068 = vlaneseq
      %v1069 = vshrl.u32 %v1068, 7
      %v1070 = vsub.s32 0, %v1069
      %v1071 = vrot.slane %v1067, %v1070
      %v1072 = vmul.f32 %v1051, %v1071
      %v1074 = vrot.slane %v1062, 1
      %v1076 = vadd.f32 %v1062, %v1074
      %v1077 = vrcp.pop %v1076
      %v1078 = vlaneseq
      %v1079 = vshrl.u32 %v1078, 7
      %v1080 = vsub.s32 0, %v1079
      %v1081 = vrot.slane %v1077, %v1080
      %v1082 = vmul.f32 %v1062, %v1081
      %v1083 = vlog2.pop %v1072
      %v1084 = vmul.f32 %v1083, 0.6931472
      %1085 = vmatprep.subr.mxu0 0.0
      %1086 = vmatpush1.msra.mxu0 %v151
      %1087 = vmatprep.subr.mxu0 0.0
      %1088 = vmatpush1.msra.mxu0 %v150
      %1089 = vmatprep.subr.mxu0 0.0
      %1090 = vmatpush1.msra.mxu0 %v149
      %1091 = vmatprep.subr.mxu0 0.0
      %1092 = vmatpush1.msra.mxu0 %v148
      %1093 = vmatprep.subr.mxu0 0.0
      %1094 = vmatpush1.msra.mxu0 %v147
      %1095 = vmatprep.subr.mxu0 0.0
      %1096 = vmatpush1.msra.mxu0 %v146
      %1097 = vmatprep.subr.mxu0 0.0
      %1098 = vmatpush1.msra.mxu0 %v145
      %1099 = vmatprep.subr.mxu0 0.0
      %1100 = vmatpush1.msra.mxu0 %v144
      %1101 = vmatprep.subr.mxu0 0.0
      %1102 = vmatpush1.msra.mxu0 %v143
      %1103 = vmatprep.subr.mxu0 0.0
      %1104 = vmatpush1.msra.mxu0 %v142
      %1105 = vmatprep.subr.mxu0 0.0
      %1106 = vmatpush1.msra.mxu0 %v141
      %1107 = vmatprep.subr.mxu0 0.0
      %1108 = vmatpush1.msra.mxu0 %v140
      %1109 = vmatprep.subr.mxu0 0.0
      %1110 = vmatpush1.msra.mxu0 %v139
      %1111 = vmatprep.subr.mxu0 0.0
      %1112 = vmatpush1.msra.mxu0 %v138
      %1113 = vmatprep.subr.mxu0 0.0
      %1114 = vmatpush1.msra.mxu0 %v137
      %1115 = vmatprep.subr.mxu0 0.0
      %1116 = vmatpush1.msra.mxu0 %v136
      %1117 = vmatprep.subr.mxu0 0.0
      %1118 = vmatpush2.msra.mxu0 0.0
      %1119 = vmatprep.subr.mxu0 0.0
      %1120 = vmatpush2.msra.mxu0 0.0
      %1121 = vmatprep.subr.mxu0 0.0
      %1122 = vmatpush2.msra.mxu0 0.0
      %1123 = vmatprep.subr.mxu0 0.0
      %1124 = vmatpush2.msra.mxu0 0.0
      %1125 = vmatprep.subr.mxu0 0.0
      %1126 = vmatpush2.msra.mxu0 0.0
      %1127 = vmatprep.subr.mxu0 0.0
      %1128 = vmatpush2.msra.mxu0 0.0
      %1129 = vmatprep.subr.mxu0 0.0
      %1130 = vmatpush2.msra.mxu0 0.0
      %1131 = vmatprep.subr.mxu0 0.0
      %1132 = vmatpush2.msra.mxu0 0.0
      %1133 = vmatprep.subr.mxu0 0.0
      %1134 = vmatpush2.msra.mxu0 0.0
      %1135 = vmatprep.subr.mxu0 0.0
      %1136 = vmatpush2.msra.mxu0 0.0
      %1137 = vmatprep.subr.mxu0 0.0
      %1138 = vmatpush2.msra.mxu0 0.0
      %1139 = vmatprep.subr.mxu0 0.0
      %1140 = vmatpush2.msra.mxu0 0.0
      %1141 = vmatprep.subr.mxu0 0.0
      %1142 = vmatpush2.msra.mxu0 0.0
      %1143 = vmatprep.subr.mxu0 0.0
      %1144 = vmatpush2.msra.mxu0 0.0
      %1145 = vmatprep.subr.mxu0 0.0
      %1146 = vmatpush2.msra.mxu0 0.0
      %1147 = vmatprep.subr.mxu0 0.0
      %1148 = vmatpush2.msra.mxu0 0.0
      %1149 = vmatprep.mubr.f32.mxu0 0.0
      %1150 = vmatmul.mubr.f32.gmra.mxu0 %v1084
      %v1151 = vpop.f32.mrf.mxu0
      %v1152 = vadd.f32 0.0, %v1151
      %v1153 = vpop.f32.mrf.mxu0
      %1154 = vdwg.mxu0
      %v1155 = vadd.f32 %v169, %v1152
      %v1156 = vlog2.pop %v1082
      %v1157 = vmul.f32 %v1156, 0.6931472
      %1158 = vmatprep.subr.mxu0 0.0
      %1159 = vmatpush1.msra.mxu0 %v167
      %1160 = vmatprep.subr.mxu0 0.0
      %1161 = vmatpush1.msra.mxu0 %v166
      %1162 = vmatprep.subr.mxu0 0.0
      %1163 = vmatpush1.msra.mxu0 %v165
      %1164 = vmatprep.subr.mxu0 0.0
      %1165 = vmatpush1.msra.mxu0 %v164
      %1166 = vmatprep.subr.mxu0 0.0
      %1167 = vmatpush1.msra.mxu0 %v163
      %1168 = vmatprep.subr.mxu0 0.0
      %1169 = vmatpush1.msra.mxu0 %v162
      %1170 = vmatprep.subr.mxu0 0.0
      %1171 = vmatpush1.msra.mxu0 %v161
      %1172 = vmatprep.subr.mxu0 0.0
      %1173 = vmatpush1.msra.mxu0 %v160
      %1174 = vmatprep.subr.mxu0 0.0
      %1175 = vmatpush1.msra.mxu0 %v159
      %1176 = vmatprep.subr.mxu0 0.0
      %1177 = vmatpush1.msra.mxu0 %v158
      %1178 = vmatprep.subr.mxu0 0.0
      %1179 = vmatpush1.msra.mxu0 %v157
      %1180 = vmatprep.subr.mxu0 0.0
      %1181 = vmatpush1.msra.mxu0 %v156
      %1182 = vmatprep.subr.mxu0 0.0
      %1183 = vmatpush1.msra.mxu0 %v155
      %1184 = vmatprep.subr.mxu0 0.0
      %1185 = vmatpush1.msra.mxu0 %v154
      %1186 = vmatprep.subr.mxu0 0.0
      %1187 = vmatpush1.msra.mxu0 %v153
      %1188 = vmatprep.subr.mxu0 0.0
      %1189 = vmatpush1.msra.mxu0 %v152
      %1190 = vmatprep.subr.mxu0 0.0
      %1191 = vmatpush2.msra.mxu0 0.0
      %1192 = vmatprep.subr.mxu0 0.0
      %1193 = vmatpush2.msra.mxu0 0.0
      %1194 = vmatprep.subr.mxu0 0.0
      %1195 = vmatpush2.msra.mxu0 0.0
      %1196 = vmatprep.subr.mxu0 0.0
      %1197 = vmatpush2.msra.mxu0 0.0
      %1198 = vmatprep.subr.mxu0 0.0
      %1199 = vmatpush2.msra.mxu0 0.0
      %1200 = vmatprep.subr.mxu0 0.0
      %1201 = vmatpush2.msra.mxu0 0.0
      %1202 = vmatprep.subr.mxu0 0.0
      %1203 = vmatpush2.msra.mxu0 0.0
      %1204 = vmatprep.subr.mxu0 0.0
      %1205 = vmatpush2.msra.mxu0 0.0
      %1206 = vmatprep.subr.mxu0 0.0
      %1207 = vmatpush2.msra.mxu0 0.0
      %1208 = vmatprep.subr.mxu0 0.0
      %1209 = vmatpush2.msra.mxu0 0.0
      %1210 = vmatprep.subr.mxu0 0.0
      %1211 = vmatpush2.msra.mxu0 0.0
      %1212 = vmatprep.subr.mxu0 0.0
      %1213 = vmatpush2.msra.mxu0 0.0
      %1214 = vmatprep.subr.mxu0 0.0
      %1215 = vmatpush2.msra.mxu0 0.0
      %1216 = vmatprep.subr.mxu0 0.0
      %1217 = vmatpush2.msra.mxu0 0.0
      %1218 = vmatprep.subr.mxu0 0.0
      %1219 = vmatpush2.msra.mxu0 0.0
      %1220 = vmatprep.subr.mxu0 0.0
      %1221 = vmatpush2.msra.mxu0 0.0
      %1222 = vmatprep.mubr.f32.mxu0 0.0
      %1223 = vmatmul.mubr.f32.gmra.mxu0 %v1157
      %v1224 = vpop.f32.mrf.mxu0
      %v1225 = vadd.f32 0.0, %v1224
      %v1226 = vpop.f32.mrf.mxu0
      %1227 = vdwg.mxu0
      %v1228 = vadd.f32 %v1155, %v1225
      %v1230 = vrot.slane %v1228, 1
      %v1232 = vmax.f32 %v1228, %v1230
      %v1233 = vlaneseq
      %v1234 = vshrl.u32 %v1233, 7
      %v1235 = vsub.s32 0, %v1234
      %v1236 = vrot.slane %v1232, %v1235
      %v1237 = vsub.f32 %v1228, %v1236
      %v1238 = vmul.f32 %v1237, 1.442695
      %v1239 = vpow.pop %v1238
      %v1241 = vrot.slane %v1239, 1
      %v1243 = vadd.f32 %v1239, %v1241
      %v1244 = vrcp.pop %v1243
      %v1245 = vlaneseq
      %v1246 = vshrl.u32 %v1245, 7
      %v1247 = vsub.s32 0, %v1246
      %v1248 = vrot.slane %v1244, %v1247
      %v1249 = vmul.f32 %v1239, %v1248
      %1250 = vmatprep.subr.mxu0 0.0
      %1251 = vmatpush1.msra.mxu0 %v119
      %1252 = vmatprep.subr.mxu0 0.0
      %1253 = vmatpush1.msra.mxu0 %v118
      %1254 = vmatprep.subr.mxu0 0.0
      %1255 = vmatpush1.msra.mxu0 %v117
      %1256 = vmatprep.subr.mxu0 0.0
      %1257 = vmatpush1.msra.mxu0 %v116
      %1258 = vmatprep.subr.mxu0 0.0
      %1259 = vmatpush1.msra.mxu0 %v115
      %1260 = vmatprep.subr.mxu0 0.0
      %1261 = vmatpush1.msra.mxu0 %v114
      %1262 = vmatprep.subr.mxu0 0.0
      %1263 = vmatpush1.msra.mxu0 %v113
      %1264 = vmatprep.subr.mxu0 0.0
      %1265 = vmatpush1.msra.mxu0 %v112
      %1266 = vmatprep.subr.mxu0 0.0
      %1267 = vmatpush1.msra.mxu0 %v111
      %1268 = vmatprep.subr.mxu0 0.0
      %1269 = vmatpush1.msra.mxu0 %v110
      %1270 = vmatprep.subr.mxu0 0.0
      %1271 = vmatpush1.msra.mxu0 %v109
      %1272 = vmatprep.subr.mxu0 0.0
      %1273 = vmatpush1.msra.mxu0 %v108
      %1274 = vmatprep.subr.mxu0 0.0
      %1275 = vmatpush1.msra.mxu0 %v107
      %1276 = vmatprep.subr.mxu0 0.0
      %1277 = vmatpush1.msra.mxu0 %v106
      %1278 = vmatprep.subr.mxu0 0.0
      %1279 = vmatpush1.msra.mxu0 %v105
      %1280 = vmatprep.subr.mxu0 0.0
      %1281 = vmatpush1.msra.mxu0 %v104
      %1282 = vmatprep.subr.mxu0 0.0
      %1283 = vmatpush2.msra.mxu0 0.0
      %1284 = vmatprep.subr.mxu0 0.0
      %1285 = vmatpush2.msra.mxu0 0.0
      %1286 = vmatprep.subr.mxu0 0.0
      %1287 = vmatpush2.msra.mxu0 0.0
      %1288 = vmatprep.subr.mxu0 0.0
      %1289 = vmatpush2.msra.mxu0 0.0
      %1290 = vmatprep.subr.mxu0 0.0
      %1291 = vmatpush2.msra.mxu0 0.0
      %1292 = vmatprep.subr.mxu0 0.0
      %1293 = vmatpush2.msra.mxu0 0.0
      %1294 = vmatprep.subr.mxu0 0.0
      %1295 = vmatpush2.msra.mxu0 0.0
      %1296 = vmatprep.subr.mxu0 0.0
      %1297 = vmatpush2.msra.mxu0 0.0
      %1298 = vmatprep.subr.mxu0 0.0
      %1299 = vmatpush2.msra.mxu0 0.0
      %1300 = vmatprep.subr.mxu0 0.0
      %1301 = vmatpush2.msra.mxu0 0.0
      %1302 = vmatprep.subr.mxu0 0.0
      %1303 = vmatpush2.msra.mxu0 0.0
      %1304 = vmatprep.subr.mxu0 0.0
      %1305 = vmatpush2.msra.mxu0 0.0
      %1306 = vmatprep.subr.mxu0 0.0
      %1307 = vmatpush2.msra.mxu0 0.0
      %1308 = vmatprep.subr.mxu0 0.0
      %1309 = vmatpush2.msra.mxu0 0.0
      %1310 = vmatprep.subr.mxu0 0.0
      %1311 = vmatpush2.msra.mxu0 0.0
      %1312 = vmatprep.subr.mxu0 0.0
      %1313 = vmatpush2.msra.mxu0 0.0
      %1314 = vmatprep.mubr.f32.mxu0 0.0
      %1315 = vmatmul.mubr.f32.gmra.mxu0 %v1249
      %v1316 = vpop.f32.mrf.mxu0
      %v1317 = vadd.f32 0.0, %v1316
      %v1318 = vpop.f32.mrf.mxu0
      %1319 = vdwg.mxu0
      %1320 = vmatprep.subr.mxu0 0.0
      %1321 = vmatpush1.msra.mxu0 %v135
      %1322 = vmatprep.subr.mxu0 0.0
      %1323 = vmatpush1.msra.mxu0 %v134
      %1324 = vmatprep.subr.mxu0 0.0
      %1325 = vmatpush1.msra.mxu0 %v133
      %1326 = vmatprep.subr.mxu0 0.0
      %1327 = vmatpush1.msra.mxu0 %v132
      %1328 = vmatprep.subr.mxu0 0.0
      %1329 = vmatpush1.msra.mxu0 %v131
      %1330 = vmatprep.subr.mxu0 0.0
      %1331 = vmatpush1.msra.mxu0 %v130
      %1332 = vmatprep.subr.mxu0 0.0
      %1333 = vmatpush1.msra.mxu0 %v129
      %1334 = vmatprep.subr.mxu0 0.0
      %1335 = vmatpush1.msra.mxu0 %v128
      %1336 = vmatprep.subr.mxu0 0.0
      %1337 = vmatpush1.msra.mxu0 %v127
      %1338 = vmatprep.subr.mxu0 0.0
      %1339 = vmatpush1.msra.mxu0 %v126
      %1340 = vmatprep.subr.mxu0 0.0
      %1341 = vmatpush1.msra.mxu0 %v125
      %1342 = vmatprep.subr.mxu0 0.0
      %1343 = vmatpush1.msra.mxu0 %v124
      %1344 = vmatprep.subr.mxu0 0.0
      %1345 = vmatpush1.msra.mxu0 %v123
      %1346 = vmatprep.subr.mxu0 0.0
      %1347 = vmatpush1.msra.mxu0 %v122
      %1348 = vmatprep.subr.mxu0 0.0
      %1349 = vmatpush1.msra.mxu0 %v121
      %1350 = vmatprep.subr.mxu0 0.0
      %1351 = vmatpush1.msra.mxu0 %v120
      %1352 = vmatprep.subr.mxu0 0.0
      %1353 = vmatpush2.msra.mxu0 0.0
      %1354 = vmatprep.subr.mxu0 0.0
      %1355 = vmatpush2.msra.mxu0 0.0
      %1356 = vmatprep.subr.mxu0 0.0
      %1357 = vmatpush2.msra.mxu0 0.0
      %1358 = vmatprep.subr.mxu0 0.0
      %1359 = vmatpush2.msra.mxu0 0.0
      %1360 = vmatprep.subr.mxu0 0.0
      %1361 = vmatpush2.msra.mxu0 0.0
      %1362 = vmatprep.subr.mxu0 0.0
      %1363 = vmatpush2.msra.mxu0 0.0
      %1364 = vmatprep.subr.mxu0 0.0
      %1365 = vmatpush2.msra.mxu0 0.0
      %1366 = vmatprep.subr.mxu0 0.0
      %1367 = vmatpush2.msra.mxu0 0.0
      %1368 = vmatprep.subr.mxu0 0.0
      %1369 = vmatpush2.msra.mxu0 0.0
      %1370 = vmatprep.subr.mxu0 0.0
      %1371 = vmatpush2.msra.mxu0 0.0
      %1372 = vmatprep.subr.mxu0 0.0
      %1373 = vmatpush2.msra.mxu0 0.0
      %1374 = vmatprep.subr.mxu0 0.0
      %1375 = vmatpush2.msra.mxu0 0.0
      %1376 = vmatprep.subr.mxu0 0.0
      %1377 = vmatpush2.msra.mxu0 0.0
      %1378 = vmatprep.subr.mxu0 0.0
      %1379 = vmatpush2.msra.mxu0 0.0
      %1380 = vmatprep.subr.mxu0 0.0
      %1381 = vmatpush2.msra.mxu0 0.0
      %1382 = vmatprep.subr.mxu0 0.0
      %1383 = vmatpush2.msra.mxu0 0.0
      %1384 = vmatprep.mubr.f32.mxu0 0.0
      %1385 = vmatmul.mubr.f32.gmra.mxu0 %v1249
      %v1386 = vpop.f32.mrf.mxu0
      %v1387 = vadd.f32 0.0, %v1386
      %v1388 = vpop.f32.mrf.mxu0
      %1389 = vdwg.mxu0
      %v1390 = vrcp.pop %v1082
      %v1391 = vmul.f32 %v1317, %v1390
      %v1392 = vrcp.pop %v1072
      %v1393 = vmul.f32 %v1387, %v1392
      %v1394 = vlaneseq
      %v1395 = vshrl.u32 %v1394, 7
      %v1396 = vsub.s32 0, %v1395
      %v1397 = vrot.slane %v1391, %v1396
      %v1398 = vmul.f32 %v329, %v1397
      %v1399 = vlaneseq
      %v1400 = vshrl.u32 %v1399, 7
      %v1401 = vsub.s32 1, %v1400
      %v1402 = vrot.slane %v1391, %v1401
      %v1403 = vmul.f32 %v338, %v1402
      %v1404 = vadd.f32 %v1398, %v1403
      %v1405 = vlaneseq
      %v1406 = vshrl.u32 %v1405, 7
      %v1407 = vsub.s32 0, %v1406
      %v1408 = vrot.slane %v1393, %v1407
      %v1409 = vmul.f32 %v329, %v1408
      %v1410 = vlaneseq
      %v1411 = vshrl.u32 %v1410, 7
      %v1412 = vsub.s32 1, %v1411
      %v1413 = vrot.slane %v1393, %v1412
      %v1414 = vmul.f32 %v338, %v1413
      %v1415 = vadd.f32 %v1409, %v1414
      %v1417 = vrot.slane %v1404, 1
      %v1419 = vadd.f32 %v1404, %v1417
      %v1420 = vrcp.pop %v1419
      %v1421 = vlaneseq
      %v1422 = vshrl.u32 %v1421, 7
      %v1423 = vsub.s32 0, %v1422
      %v1424 = vrot.slane %v1420, %v1423
      %v1425 = vmul.f32 %v1404, %v1424
      %v1427 = vrot.slane %v1415, 1
      %v1429 = vadd.f32 %v1415, %v1427
      %v1430 = vrcp.pop %v1429
      %v1431 = vlaneseq
      %v1432 = vshrl.u32 %v1431, 7
      %v1433 = vsub.s32 0, %v1432
      %v1434 = vrot.slane %v1430, %v1433
      %v1435 = vmul.f32 %v1415, %v1434
      %v1436 = vlog2.pop %v1425
      %v1437 = vmul.f32 %v1436, 0.6931472
      %1438 = vmatprep.subr.mxu0 0.0
      %1439 = vmatpush1.msra.mxu0 %v151
      %1440 = vmatprep.subr.mxu0 0.0
      %1441 = vmatpush1.msra.mxu0 %v150
      %1442 = vmatprep.subr.mxu0 0.0
      %1443 = vmatpush1.msra.mxu0 %v149
      %1444 = vmatprep.subr.mxu0 0.0
      %1445 = vmatpush1.msra.mxu0 %v148
      %1446 = vmatprep.subr.mxu0 0.0
      %1447 = vmatpush1.msra.mxu0 %v147
      %1448 = vmatprep.subr.mxu0 0.0
      %1449 = vmatpush1.msra.mxu0 %v146
      %1450 = vmatprep.subr.mxu0 0.0
      %1451 = vmatpush1.msra.mxu0 %v145
      %1452 = vmatprep.subr.mxu0 0.0
      %1453 = vmatpush1.msra.mxu0 %v144
      %1454 = vmatprep.subr.mxu0 0.0
      %1455 = vmatpush1.msra.mxu0 %v143
      %1456 = vmatprep.subr.mxu0 0.0
      %1457 = vmatpush1.msra.mxu0 %v142
      %1458 = vmatprep.subr.mxu0 0.0
      %1459 = vmatpush1.msra.mxu0 %v141
      %1460 = vmatprep.subr.mxu0 0.0
      %1461 = vmatpush1.msra.mxu0 %v140
      %1462 = vmatprep.subr.mxu0 0.0
      %1463 = vmatpush1.msra.mxu0 %v139
      %1464 = vmatprep.subr.mxu0 0.0
      %1465 = vmatpush1.msra.mxu0 %v138
      %1466 = vmatprep.subr.mxu0 0.0
      %1467 = vmatpush1.msra.mxu0 %v137
      %1468 = vmatprep.subr.mxu0 0.0
      %1469 = vmatpush1.msra.mxu0 %v136
      %1470 = vmatprep.subr.mxu0 0.0
      %1471 = vmatpush2.msra.mxu0 0.0
      %1472 = vmatprep.subr.mxu0 0.0
      %1473 = vmatpush2.msra.mxu0 0.0
      %1474 = vmatprep.subr.mxu0 0.0
      %1475 = vmatpush2.msra.mxu0 0.0
      %1476 = vmatprep.subr.mxu0 0.0
      %1477 = vmatpush2.msra.mxu0 0.0
      %1478 = vmatprep.subr.mxu0 0.0
      %1479 = vmatpush2.msra.mxu0 0.0
      %1480 = vmatprep.subr.mxu0 0.0
      %1481 = vmatpush2.msra.mxu0 0.0
      %1482 = vmatprep.subr.mxu0 0.0
      %1483 = vmatpush2.msra.mxu0 0.0
      %1484 = vmatprep.subr.mxu0 0.0
      %1485 = vmatpush2.msra.mxu0 0.0
      %1486 = vmatprep.subr.mxu0 0.0
      %1487 = vmatpush2.msra.mxu0 0.0
      %1488 = vmatprep.subr.mxu0 0.0
      %1489 = vmatpush2.msra.mxu0 0.0
      %1490 = vmatprep.subr.mxu0 0.0
      %1491 = vmatpush2.msra.mxu0 0.0
      %1492 = vmatprep.subr.mxu0 0.0
      %1493 = vmatpush2.msra.mxu0 0.0
      %1494 = vmatprep.subr.mxu0 0.0
      %1495 = vmatpush2.msra.mxu0 0.0
      %1496 = vmatprep.subr.mxu0 0.0
      %1497 = vmatpush2.msra.mxu0 0.0
      %1498 = vmatprep.subr.mxu0 0.0
      %1499 = vmatpush2.msra.mxu0 0.0
      %1500 = vmatprep.subr.mxu0 0.0
      %1501 = vmatpush2.msra.mxu0 0.0
      %1502 = vmatprep.mubr.f32.mxu0 0.0
      %1503 = vmatmul.mubr.f32.gmra.mxu0 %v1437
      %v1504 = vpop.f32.mrf.mxu0
      %v1505 = vadd.f32 0.0, %v1504
      %v1506 = vpop.f32.mrf.mxu0
      %1507 = vdwg.mxu0
      %v1508 = vadd.f32 %v169, %v1505
      %v1509 = vlog2.pop %v1435
      %v1510 = vmul.f32 %v1509, 0.6931472
      %1511 = vmatprep.subr.mxu0 0.0
      %1512 = vmatpush1.msra.mxu0 %v167
      %1513 = vmatprep.subr.mxu0 0.0
      %1514 = vmatpush1.msra.mxu0 %v166
      %1515 = vmatprep.subr.mxu0 0.0
      %1516 = vmatpush1.msra.mxu0 %v165
      %1517 = vmatprep.subr.mxu0 0.0
      %1518 = vmatpush1.msra.mxu0 %v164
      %1519 = vmatprep.subr.mxu0 0.0
      %1520 = vmatpush1.msra.mxu0 %v163
      %1521 = vmatprep.subr.mxu0 0.0
      %1522 = vmatpush1.msra.mxu0 %v162
      %1523 = vmatprep.subr.mxu0 0.0
      %1524 = vmatpush1.msra.mxu0 %v161
      %1525 = vmatprep.subr.mxu0 0.0
      %1526 = vmatpush1.msra.mxu0 %v160
      %1527 = vmatprep.subr.mxu0 0.0
      %1528 = vmatpush1.msra.mxu0 %v159
      %1529 = vmatprep.subr.mxu0 0.0
      %1530 = vmatpush1.msra.mxu0 %v158
      %1531 = vmatprep.subr.mxu0 0.0
      %1532 = vmatpush1.msra.mxu0 %v157
      %1533 = vmatprep.subr.mxu0 0.0
      %1534 = vmatpush1.msra.mxu0 %v156
      %1535 = vmatprep.subr.mxu0 0.0
      %1536 = vmatpush1.msra.mxu0 %v155
      %1537 = vmatprep.subr.mxu0 0.0
      %1538 = vmatpush1.msra.mxu0 %v154
      %1539 = vmatprep.subr.mxu0 0.0
      %1540 = vmatpush1.msra.mxu0 %v153
      %1541 = vmatprep.subr.mxu0 0.0
      %1542 = vmatpush1.msra.mxu0 %v152
      %1543 = vmatprep.subr.mxu0 0.0
      %1544 = vmatpush2.msra.mxu0 0.0
      %1545 = vmatprep.subr.mxu0 0.0
      %1546 = vmatpush2.msra.mxu0 0.0
      %1547 = vmatprep.subr.mxu0 0.0
      %1548 = vmatpush2.msra.mxu0 0.0
      %1549 = vmatprep.subr.mxu0 0.0
      %1550 = vmatpush2.msra.mxu0 0.0
      %1551 = vmatprep.subr.mxu0 0.0
      %1552 = vmatpush2.msra.mxu0 0.0
      %1553 = vmatprep.subr.mxu0 0.0
      %1554 = vmatpush2.msra.mxu0 0.0
      %1555 = vmatprep.subr.mxu0 0.0
      %1556 = vmatpush2.msra.mxu0 0.0
      %1557 = vmatprep.subr.mxu0 0.0
      %1558 = vmatpush2.msra.mxu0 0.0
      %1559 = vmatprep.subr.mxu0 0.0
      %1560 = vmatpush2.msra.mxu0 0.0
      %1561 = vmatprep.subr.mxu0 0.0
      %1562 = vmatpush2.msra.mxu0 0.0
      %1563 = vmatprep.subr.mxu0 0.0
      %1564 = vmatpush2.msra.mxu0 0.0
      %1565 = vmatprep.subr.mxu0 0.0
      %1566 = vmatpush2.msra.mxu0 0.0
      %1567 = vmatprep.subr.mxu0 0.0
      %1568 = vmatpush2.msra.mxu0 0.0
      %1569 = vmatprep.subr.mxu0 0.0
      %1570 = vmatpush2.msra.mxu0 0.0
      %1571 = vmatprep.subr.mxu0 0.0
      %1572 = vmatpush2.msra.mxu0 0.0
      %1573 = vmatprep.subr.mxu0 0.0
      %1574 = vmatpush2.msra.mxu0 0.0
      %1575 = vmatprep.mubr.f32.mxu0 0.0
      %1576 = vmatmul.mubr.f32.gmra.mxu0 %v1510
      %v1577 = vpop.f32.mrf.mxu0
      %v1578 = vadd.f32 0.0, %v1577
      %v1579 = vpop.f32.mrf.mxu0
      %1580 = vdwg.mxu0
      %v1581 = vadd.f32 %v1508, %v1578
      %v1583 = vrot.slane %v1581, 1
      %v1585 = vmax.f32 %v1581, %v1583
      %v1586 = vlaneseq
      %v1587 = vshrl.u32 %v1586, 7
      %v1588 = vsub.s32 0, %v1587
      %v1589 = vrot.slane %v1585, %v1588
      %v1590 = vsub.f32 %v1581, %v1589
      %v1591 = vmul.f32 %v1590, 1.442695
      %v1592 = vpow.pop %v1591
      %v1594 = vrot.slane %v1592, 1
      %v1596 = vadd.f32 %v1592, %v1594
      %v1597 = vrcp.pop %v1596
      %v1598 = vlaneseq
      %v1599 = vshrl.u32 %v1598, 7
      %v1600 = vsub.s32 0, %v1599
      %v1601 = vrot.slane %v1597, %v1600
      %v1602 = vmul.f32 %v1592, %v1601
      %1603 = vmatprep.subr.mxu0 0.0
      %1604 = vmatpush1.msra.mxu0 %v119
      %1605 = vmatprep.subr.mxu0 0.0
      %1606 = vmatpush1.msra.mxu0 %v118
      %1607 = vmatprep.subr.mxu0 0.0
      %1608 = vmatpush1.msra.mxu0 %v117
      %1609 = vmatprep.subr.mxu0 0.0
      %1610 = vmatpush1.msra.mxu0 %v116
      %1611 = vmatprep.subr.mxu0 0.0
      %1612 = vmatpush1.msra.mxu0 %v115
      %1613 = vmatprep.subr.mxu0 0.0
      %1614 = vmatpush1.msra.mxu0 %v114
      %1615 = vmatprep.subr.mxu0 0.0
      %1616 = vmatpush1.msra.mxu0 %v113
      %1617 = vmatprep.subr.mxu0 0.0
      %1618 = vmatpush1.msra.mxu0 %v112
      %1619 = vmatprep.subr.mxu0 0.0
      %1620 = vmatpush1.msra.mxu0 %v111
      %1621 = vmatprep.subr.mxu0 0.0
      %1622 = vmatpush1.msra.mxu0 %v110
      %1623 = vmatprep.subr.mxu0 0.0
      %1624 = vmatpush1.msra.mxu0 %v109
      %1625 = vmatprep.subr.mxu0 0.0
      %1626 = vmatpush1.msra.mxu0 %v108
      %1627 = vmatprep.subr.mxu0 0.0
      %1628 = vmatpush1.msra.mxu0 %v107
      %1629 = vmatprep.subr.mxu0 0.0
      %1630 = vmatpush1.msra.mxu0 %v106
      %1631 = vmatprep.subr.mxu0 0.0
      %1632 = vmatpush1.msra.mxu0 %v105
      %1633 = vmatprep.subr.mxu0 0.0
      %1634 = vmatpush1.msra.mxu0 %v104
      %1635 = vmatprep.subr.mxu0 0.0
      %1636 = vmatpush2.msra.mxu0 0.0
      %1637 = vmatprep.subr.mxu0 0.0
      %1638 = vmatpush2.msra.mxu0 0.0
      %1639 = vmatprep.subr.mxu0 0.0
      %1640 = vmatpush2.msra.mxu0 0.0
      %1641 = vmatprep.subr.mxu0 0.0
      %1642 = vmatpush2.msra.mxu0 0.0
      %1643 = vmatprep.subr.mxu0 0.0
      %1644 = vmatpush2.msra.mxu0 0.0
      %1645 = vmatprep.subr.mxu0 0.0
      %1646 = vmatpush2.msra.mxu0 0.0
      %1647 = vmatprep.subr.mxu0 0.0
      %1648 = vmatpush2.msra.mxu0 0.0
      %1649 = vmatprep.subr.mxu0 0.0
      %1650 = vmatpush2.msra.mxu0 0.0
      %1651 = vmatprep.subr.mxu0 0.0
      %1652 = vmatpush2.msra.mxu0 0.0
      %1653 = vmatprep.subr.mxu0 0.0
      %1654 = vmatpush2.msra.mxu0 0.0
      %1655 = vmatprep.subr.mxu0 0.0
      %1656 = vmatpush2.msra.mxu0 0.0
      %1657 = vmatprep.subr.mxu0 0.0
      %1658 = vmatpush2.msra.mxu0 0.0
      %1659 = vmatprep.subr.mxu0 0.0
      %1660 = vmatpush2.msra.mxu0 0.0
      %1661 = vmatprep.subr.mxu0 0.0
      %1662 = vmatpush2.msra.mxu0 0.0
      %1663 = vmatprep.subr.mxu0 0.0
      %1664 = vmatpush2.msra.mxu0 0.0
      %1665 = vmatprep.subr.mxu0 0.0
      %1666 = vmatpush2.msra.mxu0 0.0
      %1667 = vmatprep.mubr.f32.mxu0 0.0
      %1668 = vmatmul.mubr.f32.gmra.mxu0 %v1602
      %v1669 = vpop.f32.mrf.mxu0
      %v1670 = vadd.f32 0.0, %v1669
      %v1671 = vpop.f32.mrf.mxu0
      %1672 = vdwg.mxu0
      %1673 = vmatprep.subr.mxu0 0.0
      %1674 = vmatpush1.msra.mxu0 %v135
      %1675 = vmatprep.subr.mxu0 0.0
      %1676 = vmatpush1.msra.mxu0 %v134
      %1677 = vmatprep.subr.mxu0 0.0
      %1678 = vmatpush1.msra.mxu0 %v133
      %1679 = vmatprep.subr.mxu0 0.0
      %1680 = vmatpush1.msra.mxu0 %v132
      %1681 = vmatprep.subr.mxu0 0.0
      %1682 = vmatpush1.msra.mxu0 %v131
      %1683 = vmatprep.subr.mxu0 0.0
      %1684 = vmatpush1.msra.mxu0 %v130
      %1685 = vmatprep.subr.mxu0 0.0
      %1686 = vmatpush1.msra.mxu0 %v129
      %1687 = vmatprep.subr.mxu0 0.0
      %1688 = vmatpush1.msra.mxu0 %v128
      %1689 = vmatprep.subr.mxu0 0.0
      %1690 = vmatpush1.msra.mxu0 %v127
      %1691 = vmatprep.subr.mxu0 0.0
      %1692 = vmatpush1.msra.mxu0 %v126
      %1693 = vmatprep.subr.mxu0 0.0
      %1694 = vmatpush1.msra.mxu0 %v125
      %1695 = vmatprep.subr.mxu0 0.0
      %1696 = vmatpush1.msra.mxu0 %v124
      %1697 = vmatprep.subr.mxu0 0.0
      %1698 = vmatpush1.msra.mxu0 %v123
      %1699 = vmatprep.subr.mxu0 0.0
      %1700 = vmatpush1.msra.mxu0 %v122
      %1701 = vmatprep.subr.mxu0 0.0
      %1702 = vmatpush1.msra.mxu0 %v121
      %1703 = vmatprep.subr.mxu0 0.0
      %1704 = vmatpush1.msra.mxu0 %v120
      %1705 = vmatprep.subr.mxu0 0.0
      %1706 = vmatpush2.msra.mxu0 0.0
      %1707 = vmatprep.subr.mxu0 0.0
      %1708 = vmatpush2.msra.mxu0 0.0
      %1709 = vmatprep.subr.mxu0 0.0
      %1710 = vmatpush2.msra.mxu0 0.0
      %1711 = vmatprep.subr.mxu0 0.0
      %1712 = vmatpush2.msra.mxu0 0.0
      %1713 = vmatprep.subr.mxu0 0.0
      %1714 = vmatpush2.msra.mxu0 0.0
      %1715 = vmatprep.subr.mxu0 0.0
      %1716 = vmatpush2.msra.mxu0 0.0
      %1717 = vmatprep.subr.mxu0 0.0
      %1718 = vmatpush2.msra.mxu0 0.0
      %1719 = vmatprep.subr.mxu0 0.0
      %1720 = vmatpush2.msra.mxu0 0.0
      %1721 = vmatprep.subr.mxu0 0.0
      %1722 = vmatpush2.msra.mxu0 0.0
      %1723 = vmatprep.subr.mxu0 0.0
      %1724 = vmatpush2.msra.mxu0 0.0
      %1725 = vmatprep.subr.mxu0 0.0
      %1726 = vmatpush2.msra.mxu0 0.0
      %1727 = vmatprep.subr.mxu0 0.0
      %1728 = vmatpush2.msra.mxu0 0.0
      %1729 = vmatprep.subr.mxu0 0.0
      %1730 = vmatpush2.msra.mxu0 0.0
      %1731 = vmatprep.subr.mxu0 0.0
      %1732 = vmatpush2.msra.mxu0 0.0
      %1733 = vmatprep.subr.mxu0 0.0
      %1734 = vmatpush2.msra.mxu0 0.0
      %1735 = vmatprep.subr.mxu0 0.0
      %1736 = vmatpush2.msra.mxu0 0.0
      %1737 = vmatprep.mubr.f32.mxu0 0.0
      %1738 = vmatmul.mubr.f32.gmra.mxu0 %v1602
      %v1739 = vpop.f32.mrf.mxu0
      %v1740 = vadd.f32 0.0, %v1739
      %v1741 = vpop.f32.mrf.mxu0
      %1742 = vdwg.mxu0
      %v1743 = vrcp.pop %v1435
      %v1744 = vmul.f32 %v1670, %v1743
      %v1745 = vrcp.pop %v1425
      %v1746 = vmul.f32 %v1740, %v1745
      %v1747 = vlaneseq
      %v1748 = vshrl.u32 %v1747, 7
      %v1749 = vsub.s32 0, %v1748
      %v1750 = vrot.slane %v1744, %v1749
      %v1751 = vmul.f32 %v329, %v1750
      %v1752 = vlaneseq
      %v1753 = vshrl.u32 %v1752, 7
      %v1754 = vsub.s32 1, %v1753
      %v1755 = vrot.slane %v1744, %v1754
      %v1756 = vmul.f32 %v338, %v1755
      %v1757 = vadd.f32 %v1751, %v1756
      %v1758 = vlaneseq
      %v1759 = vshrl.u32 %v1758, 7
      %v1760 = vsub.s32 0, %v1759
      %v1761 = vrot.slane %v1746, %v1760
      %v1762 = vmul.f32 %v329, %v1761
      %v1763 = vlaneseq
      %v1764 = vshrl.u32 %v1763, 7
      %v1765 = vsub.s32 1, %v1764
      %v1766 = vrot.slane %v1746, %v1765
      %v1767 = vmul.f32 %v338, %v1766
      %v1768 = vadd.f32 %v1762, %v1767
      %v1770 = vrot.slane %v1757, 1
      %v1772 = vadd.f32 %v1757, %v1770
      %v1773 = vrcp.pop %v1772
      %v1774 = vlaneseq
      %v1775 = vshrl.u32 %v1774, 7
      %v1776 = vsub.s32 0, %v1775
      %v1777 = vrot.slane %v1773, %v1776
      %v1778 = vmul.f32 %v1757, %v1777
      %v1780 = vrot.slane %v1768, 1
      %v1782 = vadd.f32 %v1768, %v1780
      %v1783 = vrcp.pop %v1782
      %v1784 = vlaneseq
      %v1785 = vshrl.u32 %v1784, 7
      %v1786 = vsub.s32 0, %v1785
      %v1787 = vrot.slane %v1783, %v1786
      %v1788 = vmul.f32 %v1768, %v1787
      %v1789 = vlog2.pop %v1778
      %v1790 = vmul.f32 %v1789, 0.6931472
      %1791 = vmatprep.subr.mxu0 0.0
      %1792 = vmatpush1.msra.mxu0 %v151
      %1793 = vmatprep.subr.mxu0 0.0
      %1794 = vmatpush1.msra.mxu0 %v150
      %1795 = vmatprep.subr.mxu0 0.0
      %1796 = vmatpush1.msra.mxu0 %v149
      %1797 = vmatprep.subr.mxu0 0.0
      %1798 = vmatpush1.msra.mxu0 %v148
      %1799 = vmatprep.subr.mxu0 0.0
      %1800 = vmatpush1.msra.mxu0 %v147
      %1801 = vmatprep.subr.mxu0 0.0
      %1802 = vmatpush1.msra.mxu0 %v146
      %1803 = vmatprep.subr.mxu0 0.0
      %1804 = vmatpush1.msra.mxu0 %v145
      %1805 = vmatprep.subr.mxu0 0.0
      %1806 = vmatpush1.msra.mxu0 %v144
      %1807 = vmatprep.subr.mxu0 0.0
      %1808 = vmatpush1.msra.mxu0 %v143
      %1809 = vmatprep.subr.mxu0 0.0
      %1810 = vmatpush1.msra.mxu0 %v142
      %1811 = vmatprep.subr.mxu0 0.0
      %1812 = vmatpush1.msra.mxu0 %v141
      %1813 = vmatprep.subr.mxu0 0.0
      %1814 = vmatpush1.msra.mxu0 %v140
      %1815 = vmatprep.subr.mxu0 0.0
      %1816 = vmatpush1.msra.mxu0 %v139
      %1817 = vmatprep.subr.mxu0 0.0
      %1818 = vmatpush1.msra.mxu0 %v138
      %1819 = vmatprep.subr.mxu0 0.0
      %1820 = vmatpush1.msra.mxu0 %v137
      %1821 = vmatprep.subr.mxu0 0.0
      %1822 = vmatpush1.msra.mxu0 %v136
      %1823 = vmatprep.subr.mxu0 0.0
      %1824 = vmatpush2.msra.mxu0 0.0
      %1825 = vmatprep.subr.mxu0 0.0
      %1826 = vmatpush2.msra.mxu0 0.0
      %1827 = vmatprep.subr.mxu0 0.0
      %1828 = vmatpush2.msra.mxu0 0.0
      %1829 = vmatprep.subr.mxu0 0.0
      %1830 = vmatpush2.msra.mxu0 0.0
      %1831 = vmatprep.subr.mxu0 0.0
      %1832 = vmatpush2.msra.mxu0 0.0
      %1833 = vmatprep.subr.mxu0 0.0
      %1834 = vmatpush2.msra.mxu0 0.0
      %1835 = vmatprep.subr.mxu0 0.0
      %1836 = vmatpush2.msra.mxu0 0.0
      %1837 = vmatprep.subr.mxu0 0.0
      %1838 = vmatpush2.msra.mxu0 0.0
      %1839 = vmatprep.subr.mxu0 0.0
      %1840 = vmatpush2.msra.mxu0 0.0
      %1841 = vmatprep.subr.mxu0 0.0
      %1842 = vmatpush2.msra.mxu0 0.0
      %1843 = vmatprep.subr.mxu0 0.0
      %1844 = vmatpush2.msra.mxu0 0.0
      %1845 = vmatprep.subr.mxu0 0.0
      %1846 = vmatpush2.msra.mxu0 0.0
      %1847 = vmatprep.subr.mxu0 0.0
      %1848 = vmatpush2.msra.mxu0 0.0
      %1849 = vmatprep.subr.mxu0 0.0
      %1850 = vmatpush2.msra.mxu0 0.0
      %1851 = vmatprep.subr.mxu0 0.0
      %1852 = vmatpush2.msra.mxu0 0.0
      %1853 = vmatprep.subr.mxu0 0.0
      %1854 = vmatpush2.msra.mxu0 0.0
      %1855 = vmatprep.mubr.f32.mxu0 0.0
      %1856 = vmatmul.mubr.f32.gmra.mxu0 %v1790
      %v1857 = vpop.f32.mrf.mxu0
      %v1858 = vadd.f32 0.0, %v1857
      %v1859 = vpop.f32.mrf.mxu0
      %1860 = vdwg.mxu0
      %v1861 = vadd.f32 %v169, %v1858
      %v1862 = vlog2.pop %v1788
      %v1863 = vmul.f32 %v1862, 0.6931472
      %1864 = vmatprep.subr.mxu0 0.0
      %1865 = vmatpush1.msra.mxu0 %v167
      %1866 = vmatprep.subr.mxu0 0.0
      %1867 = vmatpush1.msra.mxu0 %v166
      %1868 = vmatprep.subr.mxu0 0.0
      %1869 = vmatpush1.msra.mxu0 %v165
      %1870 = vmatprep.subr.mxu0 0.0
      %1871 = vmatpush1.msra.mxu0 %v164
      %1872 = vmatprep.subr.mxu0 0.0
      %1873 = vmatpush1.msra.mxu0 %v163
      %1874 = vmatprep.subr.mxu0 0.0
      %1875 = vmatpush1.msra.mxu0 %v162
      %1876 = vmatprep.subr.mxu0 0.0
      %1877 = vmatpush1.msra.mxu0 %v161
      %1878 = vmatprep.subr.mxu0 0.0
      %1879 = vmatpush1.msra.mxu0 %v160
      %1880 = vmatprep.subr.mxu0 0.0
      %1881 = vmatpush1.msra.mxu0 %v159
      %1882 = vmatprep.subr.mxu0 0.0
      %1883 = vmatpush1.msra.mxu0 %v158
      %1884 = vmatprep.subr.mxu0 0.0
      %1885 = vmatpush1.msra.mxu0 %v157
      %1886 = vmatprep.subr.mxu0 0.0
      %1887 = vmatpush1.msra.mxu0 %v156
      %1888 = vmatprep.subr.mxu0 0.0
      %1889 = vmatpush1.msra.mxu0 %v155
      %1890 = vmatprep.subr.mxu0 0.0
      %1891 = vmatpush1.msra.mxu0 %v154
      %1892 = vmatprep.subr.mxu0 0.0
      %1893 = vmatpush1.msra.mxu0 %v153
      %1894 = vmatprep.subr.mxu0 0.0
      %1895 = vmatpush1.msra.mxu0 %v152
      %1896 = vmatprep.subr.mxu0 0.0
      %1897 = vmatpush2.msra.mxu0 0.0
      %1898 = vmatprep.subr.mxu0 0.0
      %1899 = vmatpush2.msra.mxu0 0.0
      %1900 = vmatprep.subr.mxu0 0.0
      %1901 = vmatpush2.msra.mxu0 0.0
      %1902 = vmatprep.subr.mxu0 0.0
      %1903 = vmatpush2.msra.mxu0 0.0
      %1904 = vmatprep.subr.mxu0 0.0
      %1905 = vmatpush2.msra.mxu0 0.0
      %1906 = vmatprep.subr.mxu0 0.0
      %1907 = vmatpush2.msra.mxu0 0.0
      %1908 = vmatprep.subr.mxu0 0.0
      %1909 = vmatpush2.msra.mxu0 0.0
      %1910 = vmatprep.subr.mxu0 0.0
      %1911 = vmatpush2.msra.mxu0 0.0
      %1912 = vmatprep.subr.mxu0 0.0
      %1913 = vmatpush2.msra.mxu0 0.0
      %1914 = vmatprep.subr.mxu0 0.0
      %1915 = vmatpush2.msra.mxu0 0.0
      %1916 = vmatprep.subr.mxu0 0.0
      %1917 = vmatpush2.msra.mxu0 0.0
      %1918 = vmatprep.subr.mxu0 0.0
      %1919 = vmatpush2.msra.mxu0 0.0
      %1920 = vmatprep.subr.mxu0 0.0
      %1921 = vmatpush2.msra.mxu0 0.0
      %1922 = vmatprep.subr.mxu0 0.0
      %1923 = vmatpush2.msra.mxu0 0.0
      %1924 = vmatprep.subr.mxu0 0.0
      %1925 = vmatpush2.msra.mxu0 0.0
      %1926 = vmatprep.subr.mxu0 0.0
      %1927 = vmatpush2.msra.mxu0 0.0
      %1928 = vmatprep.mubr.f32.mxu0 0.0
      %1929 = vmatmul.mubr.f32.gmra.mxu0 %v1863
      %v1930 = vpop.f32.mrf.mxu0
      %v1931 = vadd.f32 0.0, %v1930
      %v1932 = vpop.f32.mrf.mxu0
      %1933 = vdwg.mxu0
      %v1934 = vadd.f32 %v1861, %v1931
      %v1936 = vrot.slane %v1934, 1
      %v1938 = vmax.f32 %v1934, %v1936
      %v1939 = vlaneseq
      %v1940 = vshrl.u32 %v1939, 7
      %v1941 = vsub.s32 0, %v1940
      %v1942 = vrot.slane %v1938, %v1941
      %v1943 = vsub.f32 %v1934, %v1942
      %v1944 = vmul.f32 %v1943, 1.442695
      %v1945 = vpow.pop %v1944
      %v1947 = vrot.slane %v1945, 1
      %v1949 = vadd.f32 %v1945, %v1947
      %v1950 = vrcp.pop %v1949
      %v1951 = vlaneseq
      %v1952 = vshrl.u32 %v1951, 7
      %v1953 = vsub.s32 0, %v1952
      %v1954 = vrot.slane %v1950, %v1953
      %v1955 = vmul.f32 %v1945, %v1954
      %v1956 = vsub.f32 %v1955, %v172
      %v1957 = vand.u32 2147483647, %v1956
      %vm1958 = vcmask 1040384
      %v1959 = vsel %vm1958, %v1957, -inf
      %1960 = vmax.xlane.f32.xlu0 %v1959
      %v1961 = vpop.xlane.xlu0 %1960
      %v1962 = vrot.slane %v1961, 4
      %v1963 = vmax.f32 %v1961, %v1962
      %v1964 = vrot.slane %v1963, 2
      %v1965 = vmax.f32 %v1963, %v1964
      %v1966 = vrot.slane %v1965, 1
      %v1967 = vmax.f32 %v1965, %v1966
      %s1968 = vtos %v1967
      %s1969 = sadd.s32 %s171, 1
    $region54: #{tpu_custom_call.1} parent=1 // loop_footer
      _
    $region55: #{tpu_custom_call.1} parent=1 // loop_footer_branch
      %170 = sbr.rel target = $region51
    $region56: #{tpu_custom_call.1} parent=1 // loop_exit
      _
    %1970 = vst [vmem:[#allocation13] sm:$0x3] %v172
    // Predicated region
    $region57: #{tpu_custom_call.1} parent=1 // pred_check
      _
    $region58: #{tpu_custom_call.1} parent=1 // pred_check_branch
      %1972 = sbr.rel (0) target = $region60
    $region59: #{tpu_custom_call.1} parent=1 // pred_region
      %s1974 = ssub.s32 32, 32
      %1975 = vsyncadd [#allocation4], %s1974
      %s1977 = sshll.u32 [#allocation13], 4
      %s1978 = int_to_ptr.vmem [resolvable:$true] %s1977
      %1980 = dma.vmem_to_hbm [thread:$0]  %s1978, 32, %s6, [#allocation4]
    $region60: #{tpu_custom_call.1} parent=1 // pred_fallthru
      _
    // Predicated region
    $region61: #{tpu_custom_call.1} parent=1 // pred_check
      _
    $region62: #{tpu_custom_call.1} parent=1 // pred_check_branch
      %1982 = sbr.rel (0) target = $region64
    $region63: #{tpu_custom_call.1} parent=1 // pred_region
      %1983 = dma.done [#allocation4], 32
    $region64: #{tpu_custom_call.1} parent=1 // pred_fallthru
      _
    %1984 = vsyncpa [#allocation3], 1
    %1985 = vsyncpa [#allocation6], 1
    %1986 = vsyncpa [#allocation9], 1
    %1987 = vsyncpa [#allocation12], 1
    %1988 = vsyncpa [#allocation4], 1

</llo_original>
